<compile_context>
chip_gen: v7x
topology: tpu7x:2x2x1
jax: 0.10.0
libtpu: 0.0.40
codegen_flags: <defaults>
</compile_context>

<pallas_src>
import numpy as np
import jax
import jax.numpy as jnp
from jax import lax
from jax.experimental import pallas as pl
from jax.experimental.pallas import tpu as pltpu

LRELU_SLOPE = 0.01      # nn.LeakyReLU() default slope
IN_EPS = 1e-5           # nn.InstanceNorm2d default eps (affine=False)
MAX_DIM = 64 * 16
OUT_PAD = 128           # lane-dense padded output width: [adv | cls | zeros]


# -----------------------------------------------------------------------------
# Kernel body
# -----------------------------------------------------------------------------
def _conv_in_lrelu(src_ref, m_ref, g_ref, so):
    """One Conv2dBlock: 4x4/s2/p1 conv -> InstanceNorm2d(affine=False) -> LeakyReLU.

    src_ref: (S+2, S*Cin) H-zero-padded activation ref (f32), lanes = (W, C)
    m_ref:   (4*S*Cin, So*Cout) bf16 stacked banded-Toeplitz conv weight
    g_ref:   (So*Cout, Cout)    f32 0/1 lane-group reducer (sum over W positions)
    returns: (So, So*Cout) f32
    """
    f32 = jnp.float32
    # Gather the 4 kernel-row taps as stride-2 sublane slices (no selector matmuls)
    # and fuse them into ONE big-K MXU matmul against the stacked Toeplitz weight.
    taps = [src_ref[pl.ds(kh, so, stride=2), :] for kh in range(4)]
    rows = jnp.concatenate(taps, axis=1)                          # (So, 4*S*Cin)
    y = jnp.dot(rows.astype(jnp.bfloat16), m_ref[...],
                preferred_element_type=f32)                       # (So, So*Cout)

    # InstanceNorm2d stats (f32): sublane reduce + one tiny reducer matmul.
    sum_y = jnp.sum(y, axis=0, keepdims=True)                     # (1, So*Cout)
    sum_y2 = jnp.sum(y * y, axis=0, keepdims=True)                # (1, So*Cout)
    st = jnp.concatenate([sum_y, sum_y2], axis=0)                 # (2, So*Cout)
    s12 = jnp.dot(st, g_ref[...], preferred_element_type=f32)     # (2, Cout)
    inv_cnt = 1.0 / float(so * so)
    mean = s12[0:1, :] * inv_cnt
    var = s12[1:2, :] * inv_cnt - mean * mean                     # one-pass var (f32)
    scale = lax.rsqrt(var + IN_EPS)                               # (1, Cout)
    shift = -mean * scale
    # Periodic lane broadcast (VPU) instead of broadcast matmuls; sublane broadcast
    # happens implicitly in the elementwise op.
    scale_b = jnp.concatenate([scale] * so, axis=1)               # (1, So*Cout)
    shift_b = jnp.concatenate([shift] * so, axis=1)
    yn = y * scale_b + shift_b
    return jnp.where(yn > 0, yn, LRELU_SLOPE * yn)                # LeakyReLU


def make_kernel(cfg):
    """cfg: tuple of (S, Cin, So, Cout) per conv layer (static)."""
    n_layers = len(cfg)

    def kernel(*refs):
        a_ref = refs[0]
        conv_refs = refs[1:1 + 2 * n_layers]
        w1_ref, b1_ref, w2_ref, b2_ref = refs[1 + 2 * n_layers:5 + 2 * n_layers]
        o_ref = refs[5 + 2 * n_layers]
        pads = refs[6 + 2 * n_layers:]          # (n_layers - 1) VMEM scratch refs

        f32 = jnp.float32
        src = a_ref                              # layer-0 input is host-padded
        y = None
        for l, (_s, _cin, so, _cout) in enumerate(cfg):
            if l > 0:
                # Stage the previous activation into an H-zero-padded scratch so the
                # next layer's taps are plain stride-2 sublane loads.  Written fully
                # every step (no cross-step state -> safe under "parallel" sharding).
                pad = pads[l - 1]
                rows_prev, lanes_prev = y.shape
                zrow = jnp.zeros((1, lanes_prev), f32)
                pad[0:1, :] = zrow
                pad[rows_prev + 1:rows_prev + 2, :] = zrow
                pad[1:rows_prev + 1, :] = y
                src = pad
            y = _conv_in_lrelu(src, conv_refs[2 * l], conv_refs[2 * l + 1], so)

        # Fused fc heads: the PyTorch NCHW h.view(N,-1) flatten is folded into the
        # host-permuted W1; spatial rows are lane-concatenated so fc1 is one big-K
        # matmul, and the block-diagonal W2 yields the lane-padded [adv|cls] output.
        s3 = cfg[-1][2]
        hflat = jnp.concatenate([y[i:i + 1, :] for i in range(s3)], axis=1)
        h1 = jnp.dot(hflat.astype(jnp.bfloat16), w1_ref[...],
                     preferred_element_type=f32) + b1_ref[...]
        h1 = jnp.where(h1 > 0, h1, LRELU_SLOPE * h1)
        o_ref[...] = jnp.dot(h1.astype(jnp.bfloat16), w2_ref[...],
                             preferred_element_type=f32) + b2_ref[...]

    return kernel


# -----------------------------------------------------------------------------
# Wrapper
# -----------------------------------------------------------------------------
def _forward_padded(x_nchw, kp):
    n, cin0, img, _ = x_nchw.shape
    # Host-side layout only: NCHW -> per-sample (H, W*C) + one zero H-pad row each side.
    a0 = jnp.transpose(x_nchw, (0, 2, 3, 1)).reshape(n, img, img * cin0)
    a0p = jnp.pad(a0, ((0, 0), (1, 1), (0, 0)))

    # Static per-layer dims derived from weight shapes.
    cfg = []
    s, cin = img, cin0
    for (_m, g) in kp["conv"]:
        so, cout = s // 2, g.shape[1]
        cfg.append((s, cin, so, cout))
        s, cin = so, cout
    cfg = tuple(cfg)

    w1p, b1, w2p, b2 = kp["head"]
    flat_in = [a0p]
    in_specs = [pl.BlockSpec((None, img + 2, img * cin0), lambda b: (b, 0, 0))]
    for (m, g) in kp["conv"]:
        flat_in += [m, g]
        in_specs += [pl.BlockSpec(m.shape, lambda b: (0, 0)),
                     pl.BlockSpec(g.shape, lambda b: (0, 0))]
    for t in (w1p, b1, w2p, b2):
        flat_in.append(t)
        in_specs.append(pl.BlockSpec(t.shape, lambda b: (0, 0)))

    # Inter-layer padded-activation scratch: (S_l + 2, S_l * Cin_l) per layer l >= 1.
    scratch = [pltpu.VMEM((c[0] + 2, c[0] * c[1]), jnp.float32) for c in cfg[1:]]

    # Advisory cost estimate for the XLA scheduler.
    flops = 0
    for (s_, ci, so, co) in cfg:
        flops += 2 * so * (4 * s_ * ci) * (so * co) + 2 * 2 * (so * co) * co
    flops += 2 * w1p.shape[0] * w1p.shape[1] + 2 * w2p.shape[0] * w2p.shape[1]
    flops *= n
    transc = n * sum(c[3] for c in cfg)
    nbytes = (a0p.size * 4 + n * OUT_PAD * 4
              + sum(m.size * 2 + g.size * 4 for (m, g) in kp["conv"])
              + w1p.size * 2 + b1.size * 4 + w2p.size * 2 + b2.size * 4)

    out = pl.pallas_call(
        make_kernel(cfg),
        out_shape=jax.ShapeDtypeStruct((n, 1, OUT_PAD), jnp.float32),
        grid_spec=pltpu.PrefetchScalarGridSpec(
            num_scalar_prefetch=0,
            grid=(n,),
            in_specs=in_specs,
            out_specs=pl.BlockSpec((None, 1, OUT_PAD), lambda b: (b, 0, 0)),
            scratch_shapes=scratch,
        ),
        compiler_params=pltpu.CompilerParams(
            dimension_semantics=("parallel",),
            vmem_limit_bytes=32 * 1024 * 1024,
        ),
        cost_estimate=pl.CostEstimate(flops=int(flops),
                                      transcendentals=int(transc),
                                      bytes_accessed=int(nbytes)),
    )(*flat_in)
    return out[:, 0, :]                           # (N, OUT_PAD)


_forward_padded_jit = jax.jit(_forward_padded)


def discriminator_predictor_forward(x_nchw, kp, n_attrs):
    out = _forward_padded_jit(x_nchw, kp)
    return out[:, :1], out[:, 1:1 + n_attrs]


# -----------------------------------------------------------------------------
# Parameter construction (synthetic, deterministic) + host-side layout work
# -----------------------------------------------------------------------------
def build_module_params(key, dim, n_layers, img_size, fc_dim, n_attrs):
    """Synthetic parameters in the original module's layout (conv HWIO)."""
    params = {"conv": []}
    n_in = 3
    for i in range(n_layers):
        n_out = min(dim * 2 ** i, MAX_DIM)
        key, kw, kb = jax.random.split(key, 3)
        w = 0.1 * jax.random.normal(kw, (4, 4, n_in, n_out), jnp.float32)
        b = 0.1 * jax.random.normal(kb, (n_out,), jnp.float32)
        params["conv"].append((w, b))
        n_in = n_out

    f_size = img_size // 2 ** n_layers
    fc_in = min(dim * 2 ** (n_layers - 1), MAX_DIM) * f_size * f_size

    def make_head(hkey, d_out):
        k1, k2, k3, k4 = jax.random.split(hkey, 4)
        w1 = 0.05 * jax.random.normal(k1, (fc_in, fc_dim), jnp.float32)
        b1 = 0.05 * jax.random.normal(k2, (fc_dim,), jnp.float32)
        w2 = 0.1 * jax.random.normal(k3, (fc_dim, d_out), jnp.float32)
        b2 = 0.1 * jax.random.normal(k4, (d_out,), jnp.float32)
        return (w1, b1, w2, b2)

    key, ka, kc = jax.random.split(key, 3)
    params["fc_adv"] = make_head(ka, 1)
    params["fc_cls"] = make_head(kc, n_attrs)
    return params


def build_kernel_params(params, img_size):
    """One-time host layout: stacked Toeplitz conv weights (bf16), lane-group
    reducers (f32), permuted/fused fc weights (bf16) and 128-padded head."""
    kp = {"conv": []}
    s = img_size
    for (w, _b) in params["conv"]:                    # conv bias cancelled by IN
        w_np = np.asarray(w, np.float32)              # (4, 4, Cin, Cout)
        cin, cout = w_np.shape[2], w_np.shape[3]
        so = s // 2
        m = np.zeros((4, s * cin, so * cout), np.float32)
        for kh in range(4):
            for wo in range(so):
                for kw_ in range(4):
                    wc = 2 * wo + kw_ - 1
                    if 0 <= wc < s:
                        m[kh, wc * cin:(wc + 1) * cin,
                          wo * cout:(wo + 1) * cout] = w_np[kh, kw_]
        kp["conv"].append((
            jnp.asarray(m.reshape(4 * s * cin, so * cout), jnp.bfloat16),
            jnp.asarray(np.tile(np.eye(cout, dtype=np.float32), (so, 1))),
        ))
        s = so

    s3 = s
    c3 = params["conv"][-1][0].shape[3]
    fc_dim = params["fc_adv"][0].shape[1]
    n_attrs = params["fc_cls"][2].shape[1]
    assert 1 + n_attrs <= OUT_PAD

    w1a, b1a, w2a, b2a = (np.asarray(t, np.float32) for t in params["fc_adv"])
    w1c, b1c, w2c, b2c = (np.asarray(t, np.float32) for t in params["fc_cls"])
    w1cat = np.concatenate([w1a, w1c], axis=1)        # (fc_in, 2*fc_dim)
    # Fold the PyTorch NCHW h.view(N, -1) flatten into a row permutation of W1
    # matching the kernel's lane-concatenated (hh, ww, cc) order.
    w1p = np.zeros_like(w1cat)
    for hh in range(s3):
        for ww in range(s3):
            for cc in range(c3):
                w1p[hh * s3 * c3 + ww * c3 + cc, :] = \
                    w1cat[cc * s3 * s3 + hh * s3 + ww, :]
    b1cat = np.concatenate([b1a, b1c])[None, :]       # (1, 2*fc_dim)
    w2p = np.zeros((2 * fc_dim, OUT_PAD), np.float32)  # block-diag, lane-padded
    w2p[:fc_dim, 0:1] = w2a
    w2p[fc_dim:, 1:1 + n_attrs] = w2c
    b2p = np.zeros((1, OUT_PAD), np.float32)
    b2p[0, 0:1] = b2a
    b2p[0, 1:1 + n_attrs] = b2c

    kp["head"] = (jnp.asarray(w1p, jnp.bfloat16), jnp.asarray(b1cat),
                  jnp.asarray(w2p, jnp.bfloat16), jnp.asarray(b2p))
    return kp


# -----------------------------------------------------------------------------
# Pure-JAX f32 reference (conv / IN / lrelu / linear heads) for checking.
# -----------------------------------------------------------------------------
def reference_forward(x_nchw, params):
    h = jnp.transpose(x_nchw, (0, 2, 3, 1))                       # NHWC
    for (w, b) in params["conv"]:
        y = lax.conv_general_dilated(
            h, w, window_strides=(2, 2), padding=((1, 1), (1, 1)),
            dimension_numbers=("NHWC", "HWIO", "NHWC")) + b       # bias kept; IN cancels
        mean = y.mean(axis=(1, 2), keepdims=True)
        var = ((y - mean) ** 2).mean(axis=(1, 2), keepdims=True)
        y = (y - mean) * lax.rsqrt(var + IN_EPS)                  # affine=False
        h = jnp.where(y > 0, y, LRELU_SLOPE * y)
    hf = jnp.transpose(h, (0, 3, 1, 2)).reshape(h.shape[0], -1)   # NCHW flatten

    def head(hh, w1, b1, w2, b2):
        h1 = hh @ w1 + b1
        h1 = jnp.where(h1 > 0, h1, LRELU_SLOPE * h1)
        return h1 @ w2 + b2

    return head(hf, *params["fc_adv"]), head(hf, *params["fc_cls"])


# -----------------------------------------------------------------------------
if __name__ == "__main__":
    # Small config consistent with the module's structure:
    # conv channels 3 -> 8 -> 16 -> 32, f_size = 2, fc_in = 128.
    N, DIM, N_LAYERS, IMG, FC_DIM, N_ATTRS = 2, 8, 3, 16, 32, 5

    key = jax.random.PRNGKey(0)
    key, kx, kpar = jax.random.split(key, 3)
    x_nchw = jax.random.normal(kx, (N, 3, IMG, IMG), jnp.float32)

    params = build_module_params(kpar, DIM, N_LAYERS, IMG, FC_DIM, N_ATTRS)
    kparams = build_kernel_params(params, IMG)

    adv, cls = discriminator_predictor_forward(x_nchw, kparams, N_ATTRS)
    jax.block_until_ready((adv, cls))

    adv_ref, cls_ref = reference_forward(x_nchw, params)
    assert adv.shape == (N, 1) and cls.shape == (N, N_ATTRS)
    # Tolerance deliberately relaxed vs. the f32 reference: MXU operands are bf16
    # (f32 accumulation / epilogue), expected |err| ~1e-3 on O(0.1) outputs.
    ATOL, RTOL = 5e-3, 5e-2
    assert jnp.allclose(adv, adv_ref, atol=ATOL, rtol=RTOL), \
        float(jnp.max(jnp.abs(adv - adv_ref)))
    assert jnp.allclose(cls, cls_ref, atol=ATOL, rtol=RTOL), \
        float(jnp.max(jnp.abs(cls - cls_ref)))

    print("KERNEL_OK")
</pallas_src>

<mosaic_0001>
module attributes {stable_mosaic.version = 11 : i64} {
  func.func @kernel(%arg0: i32, %arg1: memref<1x18x48xf32, #tpu.memory_space<vmem>>, %arg2: memref<192x64xbf16, #tpu.memory_space<vmem>>, %arg3: memref<64x8xf32, #tpu.memory_space<vmem>>, %arg4: memref<256x64xbf16, #tpu.memory_space<vmem>>, %arg5: memref<64x16xf32, #tpu.memory_space<vmem>>, %arg6: memref<256x64xbf16, #tpu.memory_space<vmem>>, %arg7: memref<64x32xf32, #tpu.memory_space<vmem>>, %arg8: memref<128x64xbf16, #tpu.memory_space<vmem>>, %arg9: memref<1x64xf32, #tpu.memory_space<vmem>>, %arg10: memref<64x128xbf16, #tpu.memory_space<vmem>>, %arg11: memref<1x128xf32, #tpu.memory_space<vmem>>, %arg12: memref<1x1x128xf32, #tpu.memory_space<vmem>>, %arg13: memref<10x64xf32, #tpu.memory_space<vmem>>, %arg14: memref<6x64xf32, #tpu.memory_space<vmem>>) attributes {dimension_semantics = [#tpu.dimension_semantics<parallel>], iteration_bounds = array<i64: 2>, scalar_prefetch = 0 : i64, scratch_operands = 2 : i64, tpu.core_type = #tpu.core_type<tc>, window_params = [{transform_indices = @transform_0, window_bounds = array<i64: 1, 18, 48>}, {pipeline_mode = #tpu.pipeline_mode<synchronous>, transform_indices = @transform_1, window_bounds = array<i64: 192, 64>}, {pipeline_mode = #tpu.pipeline_mode<synchronous>, transform_indices = @transform_2, window_bounds = array<i64: 64, 8>}, {pipeline_mode = #tpu.pipeline_mode<synchronous>, transform_indices = @transform_3, window_bounds = array<i64: 256, 64>}, {pipeline_mode = #tpu.pipeline_mode<synchronous>, transform_indices = @transform_4, window_bounds = array<i64: 64, 16>}, {pipeline_mode = #tpu.pipeline_mode<synchronous>, transform_indices = @transform_5, window_bounds = array<i64: 256, 64>}, {pipeline_mode = #tpu.pipeline_mode<synchronous>, transform_indices = @transform_6, window_bounds = array<i64: 64, 32>}, {pipeline_mode = #tpu.pipeline_mode<synchronous>, transform_indices = @transform_7, window_bounds = array<i64: 128, 64>}, {pipeline_mode = #tpu.pipeline_mode<synchronous>, transform_indices = @transform_8, window_bounds = array<i64: 1, 64>}, {pipeline_mode = #tpu.pipeline_mode<synchronous>, transform_indices = @transform_9, window_bounds = array<i64: 64, 128>}, {pipeline_mode = #tpu.pipeline_mode<synchronous>, transform_indices = @transform_10, window_bounds = array<i64: 1, 128>}, {transform_indices = @transform_11, window_bounds = array<i64: 1, 1, 128>}]} {
    %c0 = arith.constant 0 : index
    %c0_0 = arith.constant 0 : index
    %c0_1 = arith.constant 0 : index
    %0 = tpu.strided_load %arg1[%c0, %c0_0, %c0_1] {strides = array<i32: 1, 2, 1>} : memref<1x18x48xf32, #tpu.memory_space<vmem>>, vector<1x8x48xf32>
    %1 = vector.shape_cast %0 : vector<1x8x48xf32> to vector<8x48xf32>
    %c0_2 = arith.constant 0 : index
    %c1 = arith.constant 1 : index
    %c0_3 = arith.constant 0 : index
    %2 = tpu.strided_load %arg1[%c0_2, %c1, %c0_3] {strides = array<i32: 1, 2, 1>} : memref<1x18x48xf32, #tpu.memory_space<vmem>>, vector<1x8x48xf32>
    %3 = vector.shape_cast %2 : vector<1x8x48xf32> to vector<8x48xf32>
    %c0_4 = arith.constant 0 : index
    %c2 = arith.constant 2 : index
    %c0_5 = arith.constant 0 : index
    %4 = tpu.strided_load %arg1[%c0_4, %c2, %c0_5] {strides = array<i32: 1, 2, 1>} : memref<1x18x48xf32, #tpu.memory_space<vmem>>, vector<1x8x48xf32>
    %5 = vector.shape_cast %4 : vector<1x8x48xf32> to vector<8x48xf32>
    %c0_6 = arith.constant 0 : index
    %c3 = arith.constant 3 : index
    %c0_7 = arith.constant 0 : index
    %6 = tpu.strided_load %arg1[%c0_6, %c3, %c0_7] {strides = array<i32: 1, 2, 1>} : memref<1x18x48xf32, #tpu.memory_space<vmem>>, vector<1x8x48xf32>
    %7 = vector.shape_cast %6 : vector<1x8x48xf32> to vector<8x48xf32>
    %8 = tpu.concatenate %1, %3, %5, %7 in 1 : vector<8x48xf32>, vector<8x48xf32>, vector<8x48xf32>, vector<8x48xf32> -> vector<8x192xf32>
    %9 = arith.truncf %8 : vector<8x192xf32> to vector<8x192xbf16>
    %c0_8 = arith.constant 0 : index
    %c0_9 = arith.constant 0 : index
    %10 = vector.load %arg2[%c0_8, %c0_9] : memref<192x64xbf16, #tpu.memory_space<vmem>>, vector<192x64xbf16>
    %cst = arith.constant dense<0.000000e+00> : vector<8x64xf32>
    %11 = tpu.matmul %9, %10, %cst {dimension_numbers = #tpu.dot_dimension_numbers<[1], [0], [0], [1], [0, 0, 1, 1], [], []>} : vector<8x192xbf16>, vector<192x64xbf16>, vector<8x64xf32> -> vector<8x64xf32>
    %cst_10 = arith.constant dense<0.000000e+00> : vector<64xf32>
    %12 = vector.multi_reduction <add>, %11, %cst_10 [0] : vector<8x64xf32> to vector<64xf32>
    %13 = vector.shape_cast %12 : vector<64xf32> to vector<1x64xf32>
    %14 = arith.mulf %11, %11 : vector<8x64xf32>
    %cst_11 = arith.constant dense<0.000000e+00> : vector<64xf32>
    %15 = vector.multi_reduction <add>, %14, %cst_11 [0] : vector<8x64xf32> to vector<64xf32>
    %16 = vector.shape_cast %15 : vector<64xf32> to vector<1x64xf32>
    %17 = tpu.concatenate %13, %16 in 0 : vector<1x64xf32>, vector<1x64xf32> -> vector<2x64xf32>
    %c0_12 = arith.constant 0 : index
    %c0_13 = arith.constant 0 : index
    %18 = vector.load %arg3[%c0_12, %c0_13] : memref<64x8xf32, #tpu.memory_space<vmem>>, vector<64x8xf32>
    %cst_14 = arith.constant dense<0.000000e+00> : vector<2x8xf32>
    %19 = tpu.matmul %17, %18, %cst_14 {dimension_numbers = #tpu.dot_dimension_numbers<[1], [0], [0], [1], [0, 0, 1, 1], [], []>} : vector<2x64xf32>, vector<64x8xf32>, vector<2x8xf32> -> vector<2x8xf32>
    %20 = vector.extract_strided_slice %19 {offsets = [0, 0], sizes = [1, 8], strides = [1, 1]} : vector<2x8xf32> to vector<1x8xf32>
    %cst_15 = arith.constant 1.562500e-02 : f32
    %21 = vector.broadcast %cst_15 : f32 to vector<1x8xf32>
    %22 = arith.mulf %20, %21 : vector<1x8xf32>
    %23 = vector.extract_strided_slice %19 {offsets = [1, 0], sizes = [1, 8], strides = [1, 1]} : vector<2x8xf32> to vector<1x8xf32>
    %cst_16 = arith.constant 1.562500e-02 : f32
    %24 = vector.broadcast %cst_16 : f32 to vector<1x8xf32>
    %25 = arith.mulf %23, %24 : vector<1x8xf32>
    %26 = arith.mulf %22, %22 : vector<1x8xf32>
    %27 = arith.subf %25, %26 : vector<1x8xf32>
    %cst_17 = arith.constant 9.99999974E-6 : f32
    %28 = vector.broadcast %cst_17 : f32 to vector<1x8xf32>
    %29 = arith.addf %27, %28 : vector<1x8xf32>
    %30 = math.rsqrt %29 : vector<1x8xf32>
    %cst_18 = arith.constant 0.000000e+00 : f32
    %31 = vector.broadcast %cst_18 : f32 to vector<1x8xf32>
    %32 = arith.subf %31, %22 : vector<1x8xf32>
    %33 = arith.mulf %32, %30 : vector<1x8xf32>
    %34 = tpu.concatenate %30, %30, %30, %30, %30, %30, %30, %30 in 1 : vector<1x8xf32>, vector<1x8xf32>, vector<1x8xf32>, vector<1x8xf32>, vector<1x8xf32>, vector<1x8xf32>, vector<1x8xf32>, vector<1x8xf32> -> vector<1x64xf32>
    %35 = tpu.concatenate %33, %33, %33, %33, %33, %33, %33, %33 in 1 : vector<1x8xf32>, vector<1x8xf32>, vector<1x8xf32>, vector<1x8xf32>, vector<1x8xf32>, vector<1x8xf32>, vector<1x8xf32>, vector<1x8xf32> -> vector<1x64xf32>
    %36 = vector.broadcast %34 : vector<1x64xf32> to vector<8x64xf32>
    %37 = arith.mulf %11, %36 : vector<8x64xf32>
    %38 = vector.broadcast %35 : vector<1x64xf32> to vector<8x64xf32>
    %39 = arith.addf %37, %38 : vector<8x64xf32>
    %cst_19 = arith.constant 0.000000e+00 : f32
    %40 = vector.broadcast %cst_19 : f32 to vector<8x64xf32>
    %41 = arith.cmpf ogt, %39, %40 : vector<8x64xf32>
    %cst_20 = arith.constant 0.00999999977 : f32
    %42 = vector.broadcast %cst_20 : f32 to vector<8x64xf32>
    %43 = arith.mulf %42, %39 : vector<8x64xf32>
    %44 = arith.select %41, %39, %43 : vector<8x64xi1>, vector<8x64xf32>
    %cst_21 = arith.constant 0.000000e+00 : f32
    %45 = vector.broadcast %cst_21 : f32 to vector<1x64xf32>
    %c0_22 = arith.constant 0 : index
    %c0_23 = arith.constant 0 : index
    %46 = vector.load %arg13[%c0_22, %c0_23] : memref<10x64xf32, #tpu.memory_space<vmem>>, vector<1x64xf32>
    tpu.vector_store %arg13[%c0_22, %c0_23], %45 {strides = array<i32>} : memref<10x64xf32, #tpu.memory_space<vmem>>, vector<1x64xf32>,
    %c9 = arith.constant 9 : index
    %c0_24 = arith.constant 0 : index
    %47 = vector.load %arg13[%c9, %c0_24] : memref<10x64xf32, #tpu.memory_space<vmem>>, vector<1x64xf32>
    tpu.vector_store %arg13[%c9, %c0_24], %45 {strides = array<i32>} : memref<10x64xf32, #tpu.memory_space<vmem>>, vector<1x64xf32>,
    %c1_25 = arith.constant 1 : index
    %c0_26 = arith.constant 0 : index
    %48 = vector.load %arg13[%c1_25, %c0_26] : memref<10x64xf32, #tpu.memory_space<vmem>>, vector<8x64xf32>
    tpu.vector_store %arg13[%c1_25, %c0_26], %44 {strides = array<i32>} : memref<10x64xf32, #tpu.memory_space<vmem>>, vector<8x64xf32>,
    %c0_27 = arith.constant 0 : index
    %c0_28 = arith.constant 0 : index
    %49 = tpu.strided_load %arg13[%c0_27, %c0_28] {strides = array<i32: 2, 1>} : memref<10x64xf32, #tpu.memory_space<vmem>>, vector<4x64xf32>
    %c1_29 = arith.constant 1 : index
    %c0_30 = arith.constant 0 : index
    %50 = tpu.strided_load %arg13[%c1_29, %c0_30] {strides = array<i32: 2, 1>} : memref<10x64xf32, #tpu.memory_space<vmem>>, vector<4x64xf32>
    %c2_31 = arith.constant 2 : index
    %c0_32 = arith.constant 0 : index
    %51 = tpu.strided_load %arg13[%c2_31, %c0_32] {strides = array<i32: 2, 1>} : memref<10x64xf32, #tpu.memory_space<vmem>>, vector<4x64xf32>
    %c3_33 = arith.constant 3 : index
    %c0_34 = arith.constant 0 : index
    %52 = tpu.strided_load %arg13[%c3_33, %c0_34] {strides = array<i32: 2, 1>} : memref<10x64xf32, #tpu.memory_space<vmem>>, vector<4x64xf32>
    %53 = tpu.concatenate %49, %50, %51, %52 in 1 : vector<4x64xf32>, vector<4x64xf32>, vector<4x64xf32>, vector<4x64xf32> -> vector<4x256xf32>
    %54 = arith.truncf %53 : vector<4x256xf32> to vector<4x256xbf16>
    %c0_35 = arith.constant 0 : index
    %c0_36 = arith.constant 0 : index
    %55 = vector.load %arg4[%c0_35, %c0_36] : memref<256x64xbf16, #tpu.memory_space<vmem>>, vector<256x64xbf16>
    %cst_37 = arith.constant dense<0.000000e+00> : vector<4x64xf32>
    %56 = tpu.matmul %54, %55, %cst_37 {dimension_numbers = #tpu.dot_dimension_numbers<[1], [0], [0], [1], [0, 0, 1, 1], [], []>} : vector<4x256xbf16>, vector<256x64xbf16>, vector<4x64xf32> -> vector<4x64xf32>
    %cst_38 = arith.constant dense<0.000000e+00> : vector<64xf32>
    %57 = vector.multi_reduction <add>, %56, %cst_38 [0] : vector<4x64xf32> to vector<64xf32>
    %58 = vector.shape_cast %57 : vector<64xf32> to vector<1x64xf32>
    %59 = arith.mulf %56, %56 : vector<4x64xf32>
    %cst_39 = arith.constant dense<0.000000e+00> : vector<64xf32>
    %60 = vector.multi_reduction <add>, %59, %cst_39 [0] : vector<4x64xf32> to vector<64xf32>
    %61 = vector.shape_cast %60 : vector<64xf32> to vector<1x64xf32>
    %62 = tpu.concatenate %58, %61 in 0 : vector<1x64xf32>, vector<1x64xf32> -> vector<2x64xf32>
    %c0_40 = arith.constant 0 : index
    %c0_41 = arith.constant 0 : index
    %63 = vector.load %arg5[%c0_40, %c0_41] : memref<64x16xf32, #tpu.memory_space<vmem>>, vector<64x16xf32>
    %cst_42 = arith.constant dense<0.000000e+00> : vector<2x16xf32>
    %64 = tpu.matmul %62, %63, %cst_42 {dimension_numbers = #tpu.dot_dimension_numbers<[1], [0], [0], [1], [0, 0, 1, 1], [], []>} : vector<2x64xf32>, vector<64x16xf32>, vector<2x16xf32> -> vector<2x16xf32>
    %65 = vector.extract_strided_slice %64 {offsets = [0, 0], sizes = [1, 16], strides = [1, 1]} : vector<2x16xf32> to vector<1x16xf32>
    %cst_43 = arith.constant 6.250000e-02 : f32
    %66 = vector.broadcast %cst_43 : f32 to vector<1x16xf32>
    %67 = arith.mulf %65, %66 : vector<1x16xf32>
    %68 = vector.extract_strided_slice %64 {offsets = [1, 0], sizes = [1, 16], strides = [1, 1]} : vector<2x16xf32> to vector<1x16xf32>
    %cst_44 = arith.constant 6.250000e-02 : f32
    %69 = vector.broadcast %cst_44 : f32 to vector<1x16xf32>
    %70 = arith.mulf %68, %69 : vector<1x16xf32>
    %71 = arith.mulf %67, %67 : vector<1x16xf32>
    %72 = arith.subf %70, %71 : vector<1x16xf32>
    %cst_45 = arith.constant 9.99999974E-6 : f32
    %73 = vector.broadcast %cst_45 : f32 to vector<1x16xf32>
    %74 = arith.addf %72, %73 : vector<1x16xf32>
    %75 = math.rsqrt %74 : vector<1x16xf32>
    %cst_46 = arith.constant 0.000000e+00 : f32
    %76 = vector.broadcast %cst_46 : f32 to vector<1x16xf32>
    %77 = arith.subf %76, %67 : vector<1x16xf32>
    %78 = arith.mulf %77, %75 : vector<1x16xf32>
    %79 = tpu.concatenate %75, %75, %75, %75 in 1 : vector<1x16xf32>, vector<1x16xf32>, vector<1x16xf32>, vector<1x16xf32> -> vector<1x64xf32>
    %80 = tpu.concatenate %78, %78, %78, %78 in 1 : vector<1x16xf32>, vector<1x16xf32>, vector<1x16xf32>, vector<1x16xf32> -> vector<1x64xf32>
    %81 = vector.broadcast %79 : vector<1x64xf32> to vector<4x64xf32>
    %82 = arith.mulf %56, %81 : vector<4x64xf32>
    %83 = vector.broadcast %80 : vector<1x64xf32> to vector<4x64xf32>
    %84 = arith.addf %82, %83 : vector<4x64xf32>
    %cst_47 = arith.constant 0.000000e+00 : f32
    %85 = vector.broadcast %cst_47 : f32 to vector<4x64xf32>
    %86 = arith.cmpf ogt, %84, %85 : vector<4x64xf32>
    %cst_48 = arith.constant 0.00999999977 : f32
    %87 = vector.broadcast %cst_48 : f32 to vector<4x64xf32>
    %88 = arith.mulf %87, %84 : vector<4x64xf32>
    %89 = arith.select %86, %84, %88 : vector<4x64xi1>, vector<4x64xf32>
    %cst_49 = arith.constant 0.000000e+00 : f32
    %90 = vector.broadcast %cst_49 : f32 to vector<1x64xf32>
    %c0_50 = arith.constant 0 : index
    %c0_51 = arith.constant 0 : index
    %91 = vector.load %arg14[%c0_50, %c0_51] : memref<6x64xf32, #tpu.memory_space<vmem>>, vector<1x64xf32>
    tpu.vector_store %arg14[%c0_50, %c0_51], %90 {strides = array<i32>} : memref<6x64xf32, #tpu.memory_space<vmem>>, vector<1x64xf32>,
    %c5 = arith.constant 5 : index
    %c0_52 = arith.constant 0 : index
    %92 = vector.load %arg14[%c5, %c0_52] : memref<6x64xf32, #tpu.memory_space<vmem>>, vector<1x64xf32>
    tpu.vector_store %arg14[%c5, %c0_52], %90 {strides = array<i32>} : memref<6x64xf32, #tpu.memory_space<vmem>>, vector<1x64xf32>,
    %c1_53 = arith.constant 1 : index
    %c0_54 = arith.constant 0 : index
    %93 = vector.load %arg14[%c1_53, %c0_54] : memref<6x64xf32, #tpu.memory_space<vmem>>, vector<4x64xf32>
    tpu.vector_store %arg14[%c1_53, %c0_54], %89 {strides = array<i32>} : memref<6x64xf32, #tpu.memory_space<vmem>>, vector<4x64xf32>,
    %c0_55 = arith.constant 0 : index
    %c0_56 = arith.constant 0 : index
    %94 = tpu.strided_load %arg14[%c0_55, %c0_56] {strides = array<i32: 2, 1>} : memref<6x64xf32, #tpu.memory_space<vmem>>, vector<2x64xf32>
    %c1_57 = arith.constant 1 : index
    %c0_58 = arith.constant 0 : index
    %95 = tpu.strided_load %arg14[%c1_57, %c0_58] {strides = array<i32: 2, 1>} : memref<6x64xf32, #tpu.memory_space<vmem>>, vector<2x64xf32>
    %c2_59 = arith.constant 2 : index
    %c0_60 = arith.constant 0 : index
    %96 = tpu.strided_load %arg14[%c2_59, %c0_60] {strides = array<i32: 2, 1>} : memref<6x64xf32, #tpu.memory_space<vmem>>, vector<2x64xf32>
    %c3_61 = arith.constant 3 : index
    %c0_62 = arith.constant 0 : index
    %97 = tpu.strided_load %arg14[%c3_61, %c0_62] {strides = array<i32: 2, 1>} : memref<6x64xf32, #tpu.memory_space<vmem>>, vector<2x64xf32>
    %98 = tpu.concatenate %94, %95, %96, %97 in 1 : vector<2x64xf32>, vector<2x64xf32>, vector<2x64xf32>, vector<2x64xf32> -> vector<2x256xf32>
    %99 = arith.truncf %98 : vector<2x256xf32> to vector<2x256xbf16>
    %c0_63 = arith.constant 0 : index
    %c0_64 = arith.constant 0 : index
    %100 = vector.load %arg6[%c0_63, %c0_64] : memref<256x64xbf16, #tpu.memory_space<vmem>>, vector<256x64xbf16>
    %cst_65 = arith.constant dense<0.000000e+00> : vector<2x64xf32>
    %101 = tpu.matmul %99, %100, %cst_65 {dimension_numbers = #tpu.dot_dimension_numbers<[1], [0], [0], [1], [0, 0, 1, 1], [], []>} : vector<2x256xbf16>, vector<256x64xbf16>, vector<2x64xf32> -> vector<2x64xf32>
    %cst_66 = arith.constant dense<0.000000e+00> : vector<64xf32>
    %102 = vector.multi_reduction <add>, %101, %cst_66 [0] : vector<2x64xf32> to vector<64xf32>
    %103 = vector.shape_cast %102 : vector<64xf32> to vector<1x64xf32>
    %104 = arith.mulf %101, %101 : vector<2x64xf32>
    %cst_67 = arith.constant dense<0.000000e+00> : vector<64xf32>
    %105 = vector.multi_reduction <add>, %104, %cst_67 [0] : vector<2x64xf32> to vector<64xf32>
    %106 = vector.shape_cast %105 : vector<64xf32> to vector<1x64xf32>
    %107 = tpu.concatenate %103, %106 in 0 : vector<1x64xf32>, vector<1x64xf32> -> vector<2x64xf32>
    %c0_68 = arith.constant 0 : index
    %c0_69 = arith.constant 0 : index
    %108 = vector.load %arg7[%c0_68, %c0_69] : memref<64x32xf32, #tpu.memory_space<vmem>>, vector<64x32xf32>
    %cst_70 = arith.constant dense<0.000000e+00> : vector<2x32xf32>
    %109 = tpu.matmul %107, %108, %cst_70 {dimension_numbers = #tpu.dot_dimension_numbers<[1], [0], [0], [1], [0, 0, 1, 1], [], []>} : vector<2x64xf32>, vector<64x32xf32>, vector<2x32xf32> -> vector<2x32xf32>
    %110 = vector.extract_strided_slice %109 {offsets = [0, 0], sizes = [1, 32], strides = [1, 1]} : vector<2x32xf32> to vector<1x32xf32>
    %cst_71 = arith.constant 2.500000e-01 : f32
    %111 = vector.broadcast %cst_71 : f32 to vector<1x32xf32>
    %112 = arith.mulf %110, %111 : vector<1x32xf32>
    %113 = vector.extract_strided_slice %109 {offsets = [1, 0], sizes = [1, 32], strides = [1, 1]} : vector<2x32xf32> to vector<1x32xf32>
    %cst_72 = arith.constant 2.500000e-01 : f32
    %114 = vector.broadcast %cst_72 : f32 to vector<1x32xf32>
    %115 = arith.mulf %113, %114 : vector<1x32xf32>
    %116 = arith.mulf %112, %112 : vector<1x32xf32>
    %117 = arith.subf %115, %116 : vector<1x32xf32>
    %cst_73 = arith.constant 9.99999974E-6 : f32
    %118 = vector.broadcast %cst_73 : f32 to vector<1x32xf32>
    %119 = arith.addf %117, %118 : vector<1x32xf32>
    %120 = math.rsqrt %119 : vector<1x32xf32>
    %cst_74 = arith.constant 0.000000e+00 : f32
    %121 = vector.broadcast %cst_74 : f32 to vector<1x32xf32>
    %122 = arith.subf %121, %112 : vector<1x32xf32>
    %123 = arith.mulf %122, %120 : vector<1x32xf32>
    %124 = tpu.concatenate %120, %120 in 1 : vector<1x32xf32>, vector<1x32xf32> -> vector<1x64xf32>
    %125 = tpu.concatenate %123, %123 in 1 : vector<1x32xf32>, vector<1x32xf32> -> vector<1x64xf32>
    %126 = vector.broadcast %124 : vector<1x64xf32> to vector<2x64xf32>
    %127 = arith.mulf %101, %126 : vector<2x64xf32>
    %128 = vector.broadcast %125 : vector<1x64xf32> to vector<2x64xf32>
    %129 = arith.addf %127, %128 : vector<2x64xf32>
    %cst_75 = arith.constant 0.000000e+00 : f32
    %130 = vector.broadcast %cst_75 : f32 to vector<2x64xf32>
    %131 = arith.cmpf ogt, %129, %130 : vector<2x64xf32>
    %cst_76 = arith.constant 0.00999999977 : f32
    %132 = vector.broadcast %cst_76 : f32 to vector<2x64xf32>
    %133 = arith.mulf %132, %129 : vector<2x64xf32>
    %134 = arith.select %131, %129, %133 : vector<2x64xi1>, vector<2x64xf32>
    %135 = vector.extract_strided_slice %134 {offsets = [0, 0], sizes = [1, 64], strides = [1, 1]} : vector<2x64xf32> to vector<1x64xf32>
    %136 = vector.extract_strided_slice %134 {offsets = [1, 0], sizes = [1, 64], strides = [1, 1]} : vector<2x64xf32> to vector<1x64xf32>
    %137 = tpu.concatenate %135, %136 in 1 : vector<1x64xf32>, vector<1x64xf32> -> vector<1x128xf32>
    %138 = arith.truncf %137 : vector<1x128xf32> to vector<1x128xbf16>
    %c0_77 = arith.constant 0 : index
    %c0_78 = arith.constant 0 : index
    %139 = vector.load %arg8[%c0_77, %c0_78] : memref<128x64xbf16, #tpu.memory_space<vmem>>, vector<128x64xbf16>
    %cst_79 = arith.constant dense<0.000000e+00> : vector<1x64xf32>
    %140 = tpu.matmul %138, %139, %cst_79 {dimension_numbers = #tpu.dot_dimension_numbers<[1], [0], [0], [1], [0, 0, 1, 1], [], []>} : vector<1x128xbf16>, vector<128x64xbf16>, vector<1x64xf32> -> vector<1x64xf32>
    %c0_80 = arith.constant 0 : index
    %c0_81 = arith.constant 0 : index
    %141 = vector.load %arg9[%c0_80, %c0_81] : memref<1x64xf32, #tpu.memory_space<vmem>>, vector<1x64xf32>
    %142 = arith.addf %140, %141 : vector<1x64xf32>
    %cst_82 = arith.constant 0.000000e+00 : f32
    %143 = vector.broadcast %cst_82 : f32 to vector<1x64xf32>
    %144 = arith.cmpf ogt, %142, %143 : vector<1x64xf32>
    %cst_83 = arith.constant 0.00999999977 : f32
    %145 = vector.broadcast %cst_83 : f32 to vector<1x64xf32>
    %146 = arith.mulf %145, %142 : vector<1x64xf32>
    %147 = arith.select %144, %142, %146 : vector<1x64xi1>, vector<1x64xf32>
    %148 = arith.truncf %147 : vector<1x64xf32> to vector<1x64xbf16>
    %c0_84 = arith.constant 0 : index
    %c0_85 = arith.constant 0 : index
    %149 = vector.load %arg10[%c0_84, %c0_85] : memref<64x128xbf16, #tpu.memory_space<vmem>>, vector<64x128xbf16>
    %cst_86 = arith.constant dense<0.000000e+00> : vector<1x128xf32>
    %150 = tpu.matmul %148, %149, %cst_86 {dimension_numbers = #tpu.dot_dimension_numbers<[1], [0], [0], [1], [0, 0, 1, 1], [], []>} : vector<1x64xbf16>, vector<64x128xbf16>, vector<1x128xf32> -> vector<1x128xf32>
    %c0_87 = arith.constant 0 : index
    %c0_88 = arith.constant 0 : index
    %151 = vector.load %arg11[%c0_87, %c0_88] : memref<1x128xf32, #tpu.memory_space<vmem>>, vector<1x128xf32>
    %152 = arith.addf %150, %151 : vector<1x128xf32>
    %c0_89 = arith.constant 0 : index
    %c0_90 = arith.constant 0 : index
    %c0_91 = arith.constant 0 : index
    %153 = vector.load %arg12[%c0_89, %c0_90, %c0_91] : memref<1x1x128xf32, #tpu.memory_space<vmem>>, vector<1x1x128xf32>
    %154 = vector.shape_cast %153 : vector<1x1x128xf32> to vector<1x128xf32>
    %155 = vector.shape_cast %152 : vector<1x128xf32> to vector<1x1x128xf32>
    tpu.vector_store %arg12[%c0_89, %c0_90, %c0_91], %155 {strides = array<i32>} : memref<1x1x128xf32, #tpu.memory_space<vmem>>, vector<1x1x128xf32>,
    return
  }
  func.func @transform_0(%arg0: i32) -> (i32, i32, i32) {
    %c0_i32 = arith.constant 0 : i32
    %c0_i32_0 = arith.constant 0 : i32
    %c0_i32_1 = arith.constant 0 : i32
    return %arg0, %c0_i32, %c0_i32_0 : i32, i32, i32
  }
  func.func @transform_1(%arg0: i32) -> (i32, i32) {
    %c0_i32 = arith.constant 0 : i32
    %c0_i32_0 = arith.constant 0 : i32
    %c0_i32_1 = arith.constant 0 : i32
    return %c0_i32, %c0_i32_0 : i32, i32
  }
  func.func @transform_2(%arg0: i32) -> (i32, i32) {
    %c0_i32 = arith.constant 0 : i32
    %c0_i32_0 = arith.constant 0 : i32
    %c0_i32_1 = arith.constant 0 : i32
    return %c0_i32, %c0_i32_0 : i32, i32
  }
  func.func @transform_3(%arg0: i32) -> (i32, i32) {
    %c0_i32 = arith.constant 0 : i32
    %c0_i32_0 = arith.constant 0 : i32
    %c0_i32_1 = arith.constant 0 : i32
    return %c0_i32, %c0_i32_0 : i32, i32
  }
  func.func @transform_4(%arg0: i32) -> (i32, i32) {
    %c0_i32 = arith.constant 0 : i32
    %c0_i32_0 = arith.constant 0 : i32
    %c0_i32_1 = arith.constant 0 : i32
    return %c0_i32, %c0_i32_0 : i32, i32
  }
  func.func @transform_5(%arg0: i32) -> (i32, i32) {
    %c0_i32 = arith.constant 0 : i32
    %c0_i32_0 = arith.constant 0 : i32
    %c0_i32_1 = arith.constant 0 : i32
    return %c0_i32, %c0_i32_0 : i32, i32
  }
  func.func @transform_6(%arg0: i32) -> (i32, i32) {
    %c0_i32 = arith.constant 0 : i32
    %c0_i32_0 = arith.constant 0 : i32
    %c0_i32_1 = arith.constant 0 : i32
    return %c0_i32, %c0_i32_0 : i32, i32
  }
  func.func @transform_7(%arg0: i32) -> (i32, i32) {
    %c0_i32 = arith.constant 0 : i32
    %c0_i32_0 = arith.constant 0 : i32
    %c0_i32_1 = arith.constant 0 : i32
    return %c0_i32, %c0_i32_0 : i32, i32
  }
  func.func @transform_8(%arg0: i32) -> (i32, i32) {
    %c0_i32 = arith.constant 0 : i32
    %c0_i32_0 = arith.constant 0 : i32
    %c0_i32_1 = arith.constant 0 : i32
    return %c0_i32, %c0_i32_0 : i32, i32
  }
  func.func @transform_9(%arg0: i32) -> (i32, i32) {
    %c0_i32 = arith.constant 0 : i32
    %c0_i32_0 = arith.constant 0 : i32
    %c0_i32_1 = arith.constant 0 : i32
    return %c0_i32, %c0_i32_0 : i32, i32
  }
  func.func @transform_10(%arg0: i32) -> (i32, i32) {
    %c0_i32 = arith.constant 0 : i32
    %c0_i32_0 = arith.constant 0 : i32
    %c0_i32_1 = arith.constant 0 : i32
    return %c0_i32, %c0_i32_0 : i32, i32
  }
  func.func @transform_11(%arg0: i32) -> (i32, i32, i32) {
    %c0_i32 = arith.constant 0 : i32
    %c0_i32_0 = arith.constant 0 : i32
    %c0_i32_1 = arith.constant 0 : i32
    return %arg0, %c0_i32, %c0_i32_0 : i32, i32, i32
  }
}

</mosaic_0001>

<llo_original>
// kernel: _forward_padded.1
$region0: #{_forward_padded.1}
  #allocation0 [shape = 'u32[]', space=smem, size = 0x4, offset = 0x4, fixed_abs, tag = 'smem constant byte address 0x4 - core index']
  #allocation1 [shape = 'u32[144,128]{1,0:T(1,128)}', space=vmem, size = 0x12000, scoped, tag = 'internal scratch']
  #allocation2 [shape = 'f32[10,64]{1,0:T(8,128)}', space=vmem, size = 0x2000, scoped, tag = 'scratch operand']
  #allocation3 [shape = 'f32[6,64]{1,0:T(8,128)}', space=vmem, size = 0x1000, scoped, tag = 'scratch operand']
  %s0 = inlined_call_operand.vmem [shape: f32[2,18,48], index: 0, kind: input, shape index: {}]
  %s1 = inlined_call_operand.vmem [shape: bf16[192,64], index: 1, kind: input, shape index: {}]
  %s2 = inlined_call_operand.vmem [shape: f32[64,8], index: 2, kind: input, shape index: {}]
  %s3 = inlined_call_operand.vmem [shape: bf16[256,64], index: 3, kind: input, shape index: {}]
  %s4 = inlined_call_operand.vmem [shape: f32[64,16], index: 4, kind: input, shape index: {}]
  %s5 = inlined_call_operand.vmem [shape: bf16[256,64], index: 5, kind: input, shape index: {}]
  %s6 = inlined_call_operand.vmem [shape: f32[64,32], index: 6, kind: input, shape index: {}]
  %s7 = inlined_call_operand.vmem [shape: bf16[128,64], index: 7, kind: input, shape index: {}]
  %s8 = inlined_call_operand.vmem [shape: f32[1,64], index: 8, kind: input, shape index: {}]
  %s9 = inlined_call_operand.vmem [shape: bf16[64,128], index: 9, kind: input, shape index: {}]
  %s10 = inlined_call_operand.vmem [shape: f32[1,128], index: 10, kind: input, shape index: {}]
  %s11 = inlined_call_operand.hbm [shape: f32[2,1,128], index: 11, kind: output, shape index: {}]
  %s12 = sld [smem:[#allocation0]]
  $region77: #{_forward_padded.1} parent=0
    _
  %s14 = ssub.s32 1, %s12
  %s15 = scalar_select 0, %s14, %s12
  $region1: #{_forward_padded.1} parent=0
    #allocation4 [shape = 'u8[1024]{0}', space=vmem, size = 0x400, scoped, tag = 'output window, operand 0']
    #allocation5 [shape = 's32[2]{0}', space=sflag, size = 0x8, scoped, tag = 'scoped memory for _forward_padded.1']
    %16 = vsyncpa [#allocation5], 0
    %s17 = scalar_lea.sflag [#allocation5], 1
    %18 = vsyncpa %s17, 0
    loop: start=0, step=1, limit=4
    $region2: #{_forward_padded.1} parent=1 // loop_pre_header
      _
    $region3: #{_forward_padded.1} parent=1 // loop_header
      %s20 = sphi 0, %s24
      %p21 = scmp.ge.s32.totalorder %s20, 4
      %s30 = sphi 0, %s32
      %s33 = sphi 0, %s30
      %s34 = sphi 0, %s33
      %s50 = sphi 0, %s34
      %s54 = sphi 0, %s54
      %s56 = sphi 0, %s54
      %s57 = sphi 0, %s56
      %s71 = sphi 0, %s57
      %s75 = sphi 0, %s75
      %s77 = sphi 0, %s75
      %s78 = sphi 0, %s77
      %s92 = sphi 0, %s78
      %s96 = sphi 0, %s96
      %s98 = sphi 0, %s96
      %s99 = sphi 0, %s98
      %s113 = sphi 0, %s99
      %s117 = sphi 0, %s117
      %s119 = sphi 0, %s117
      %s120 = sphi 0, %s119
      %s134 = sphi 0, %s120
      %s138 = sphi 0, %s138
      %s140 = sphi 0, %s138
      %s141 = sphi 0, %s140
      %s155 = sphi 0, %s141
      %s159 = sphi 0, %s159
      %s161 = sphi 0, %s159
      %s162 = sphi 0, %s161
      %s176 = sphi 0, %s162
      %s180 = sphi 0, %s180
      %s182 = sphi 0, %s180
      %s183 = sphi 0, %s182
      %s197 = sphi 0, %s183
      %s201 = sphi 0, %s201
      %s203 = sphi 0, %s201
      %s204 = sphi 0, %s203
      %s218 = sphi 0, %s204
      %s222 = sphi 0, %s222
      %s224 = sphi 0, %s222
      %s225 = sphi 0, %s224
      %s239 = sphi 0, %s225
      %s243 = sphi 0, %s243
      %s245 = sphi 0, %s243
      %s246 = sphi 0, %s245
      %s260 = sphi 0, %s246
      %s266 = sphi 0, %s268
      %s269 = sphi 0, %s266
      %s270 = sphi 0, %s269
      %s286 = sphi 0, %s270
    $region4: #{_forward_padded.1} parent=1 // loop_header_branch
      %23 = sbr.rel (%p21) target = $region8
    $region5: #{_forward_padded.1} parent=1 // loop_body
      %s25 = ssub.s32 %s20, 1
      %s26 = ssub.s32 %s20, 2
      %s27 = sadd.s32 %s20, 1
      %s28 = ssub.s32 %s20, %s27
      %p29 = scmp.eq.s32.totalorder %s28, 0
      %s31 = sadd.s32 %s30, 1
      %s32 = scalar_select %p29, %s30, %s31
      %p35 = pneg %p29
      %p36 = scmp.eq.s32.totalorder %s20, 1
      %p37 = por %p35, %p36
      %p38 = scmp.ne.s32.totalorder %s30, %s33
      %p39 = scmp.eq.s32.totalorder %s20, 0
      %p40 = por %p38, %p39
      %p41 = scmp.ne.s32.totalorder %s30, %s33
      %p42 = scmp.eq.s32.totalorder %s25, 1
      %p43 = por %p41, %p42
      %p44 = scmp.ne.s32.totalorder %s33, %s34
      %p45 = scmp.eq.s32.totalorder %s25, 0
      %p46 = por %p44, %p45
      %p47 = scmp.ne.s32.totalorder %s33, %s34
      %p48 = scmp.eq.s32.totalorder %s26, 1
      %p49 = por %p47, %p48
      %p51 = scmp.ne.s32.totalorder %s34, %s50
      %p52 = scmp.eq.s32.totalorder %s26, 0
      %p53 = por %p51, %p52
      %s55 = sadd.s32 %s54, 1
      %p58 = scmp.eq.s32.totalorder %s20, 1
      %p59 = scmp.ne.s32.totalorder %s54, %s56
      %p60 = scmp.eq.s32.totalorder %s20, 0
      %p61 = por %p59, %p60
      %p62 = scmp.ne.s32.totalorder %s54, %s56
      %p63 = scmp.eq.s32.totalorder %s25, 1
      %p64 = por %p62, %p63
      %p65 = scmp.ne.s32.totalorder %s56, %s57
      %p66 = scmp.eq.s32.totalorder %s25, 0
      %p67 = por %p65, %p66
      %p68 = scmp.ne.s32.totalorder %s56, %s57
      %p69 = scmp.eq.s32.totalorder %s26, 1
      %p70 = por %p68, %p69
      %p72 = scmp.ne.s32.totalorder %s57, %s71
      %p73 = scmp.eq.s32.totalorder %s26, 0
      %p74 = por %p72, %p73
      %s76 = sadd.s32 %s75, 1
      %p79 = scmp.eq.s32.totalorder %s20, 1
      %p80 = scmp.ne.s32.totalorder %s75, %s77
      %p81 = scmp.eq.s32.totalorder %s20, 0
      %p82 = por %p80, %p81
      %p83 = scmp.ne.s32.totalorder %s75, %s77
      %p84 = scmp.eq.s32.totalorder %s25, 1
      %p85 = por %p83, %p84
      %p86 = scmp.ne.s32.totalorder %s77, %s78
      %p87 = scmp.eq.s32.totalorder %s25, 0
      %p88 = por %p86, %p87
      %p89 = scmp.ne.s32.totalorder %s77, %s78
      %p90 = scmp.eq.s32.totalorder %s26, 1
      %p91 = por %p89, %p90
      %p93 = scmp.ne.s32.totalorder %s78, %s92
      %p94 = scmp.eq.s32.totalorder %s26, 0
      %p95 = por %p93, %p94
      %s97 = sadd.s32 %s96, 1
      %p100 = scmp.eq.s32.totalorder %s20, 1
      %p101 = scmp.ne.s32.totalorder %s96, %s98
      %p102 = scmp.eq.s32.totalorder %s20, 0
      %p103 = por %p101, %p102
      %p104 = scmp.ne.s32.totalorder %s96, %s98
      %p105 = scmp.eq.s32.totalorder %s25, 1
      %p106 = por %p104, %p105
      %p107 = scmp.ne.s32.totalorder %s98, %s99
      %p108 = scmp.eq.s32.totalorder %s25, 0
      %p109 = por %p107, %p108
      %p110 = scmp.ne.s32.totalorder %s98, %s99
      %p111 = scmp.eq.s32.totalorder %s26, 1
      %p112 = por %p110, %p111
      %p114 = scmp.ne.s32.totalorder %s99, %s113
      %p115 = scmp.eq.s32.totalorder %s26, 0
      %p116 = por %p114, %p115
      %s118 = sadd.s32 %s117, 1
      %p121 = scmp.eq.s32.totalorder %s20, 1
      %p122 = scmp.ne.s32.totalorder %s117, %s119
      %p123 = scmp.eq.s32.totalorder %s20, 0
      %p124 = por %p122, %p123
      %p125 = scmp.ne.s32.totalorder %s117, %s119
      %p126 = scmp.eq.s32.totalorder %s25, 1
      %p127 = por %p125, %p126
      %p128 = scmp.ne.s32.totalorder %s119, %s120
      %p129 = scmp.eq.s32.totalorder %s25, 0
      %p130 = por %p128, %p129
      %p131 = scmp.ne.s32.totalorder %s119, %s120
      %p132 = scmp.eq.s32.totalorder %s26, 1
      %p133 = por %p131, %p132
      %p135 = scmp.ne.s32.totalorder %s120, %s134
      %p136 = scmp.eq.s32.totalorder %s26, 0
      %p137 = por %p135, %p136
      %s139 = sadd.s32 %s138, 1
      %p142 = scmp.eq.s32.totalorder %s20, 1
      %p143 = scmp.ne.s32.totalorder %s138, %s140
      %p144 = scmp.eq.s32.totalorder %s20, 0
      %p145 = por %p143, %p144
      %p146 = scmp.ne.s32.totalorder %s138, %s140
      %p147 = scmp.eq.s32.totalorder %s25, 1
      %p148 = por %p146, %p147
      %p149 = scmp.ne.s32.totalorder %s140, %s141
      %p150 = scmp.eq.s32.totalorder %s25, 0
      %p151 = por %p149, %p150
      %p152 = scmp.ne.s32.totalorder %s140, %s141
      %p153 = scmp.eq.s32.totalorder %s26, 1
      %p154 = por %p152, %p153
      %p156 = scmp.ne.s32.totalorder %s141, %s155
      %p157 = scmp.eq.s32.totalorder %s26, 0
      %p158 = por %p156, %p157
      %s160 = sadd.s32 %s159, 1
      %p163 = scmp.eq.s32.totalorder %s20, 1
      %p164 = scmp.ne.s32.totalorder %s159, %s161
      %p165 = scmp.eq.s32.totalorder %s20, 0
      %p166 = por %p164, %p165
      %p167 = scmp.ne.s32.totalorder %s159, %s161
      %p168 = scmp.eq.s32.totalorder %s25, 1
      %p169 = por %p167, %p168
      %p170 = scmp.ne.s32.totalorder %s161, %s162
      %p171 = scmp.eq.s32.totalorder %s25, 0
      %p172 = por %p170, %p171
      %p173 = scmp.ne.s32.totalorder %s161, %s162
      %p174 = scmp.eq.s32.totalorder %s26, 1
      %p175 = por %p173, %p174
      %p177 = scmp.ne.s32.totalorder %s162, %s176
      %p178 = scmp.eq.s32.totalorder %s26, 0
      %p179 = por %p177, %p178
      %s181 = sadd.s32 %s180, 1
      %p184 = scmp.eq.s32.totalorder %s20, 1
      %p185 = scmp.ne.s32.totalorder %s180, %s182
      %p186 = scmp.eq.s32.totalorder %s20, 0
      %p187 = por %p185, %p186
      %p188 = scmp.ne.s32.totalorder %s180, %s182
      %p189 = scmp.eq.s32.totalorder %s25, 1
      %p190 = por %p188, %p189
      %p191 = scmp.ne.s32.totalorder %s182, %s183
      %p192 = scmp.eq.s32.totalorder %s25, 0
      %p193 = por %p191, %p192
      %p194 = scmp.ne.s32.totalorder %s182, %s183
      %p195 = scmp.eq.s32.totalorder %s26, 1
      %p196 = por %p194, %p195
      %p198 = scmp.ne.s32.totalorder %s183, %s197
      %p199 = scmp.eq.s32.totalorder %s26, 0
      %p200 = por %p198, %p199
      %s202 = sadd.s32 %s201, 1
      %p205 = scmp.eq.s32.totalorder %s20, 1
      %p206 = scmp.ne.s32.totalorder %s201, %s203
      %p207 = scmp.eq.s32.totalorder %s20, 0
      %p208 = por %p206, %p207
      %p209 = scmp.ne.s32.totalorder %s201, %s203
      %p210 = scmp.eq.s32.totalorder %s25, 1
      %p211 = por %p209, %p210
      %p212 = scmp.ne.s32.totalorder %s203, %s204
      %p213 = scmp.eq.s32.totalorder %s25, 0
      %p214 = por %p212, %p213
      %p215 = scmp.ne.s32.totalorder %s203, %s204
      %p216 = scmp.eq.s32.totalorder %s26, 1
      %p217 = por %p215, %p216
      %p219 = scmp.ne.s32.totalorder %s204, %s218
      %p220 = scmp.eq.s32.totalorder %s26, 0
      %p221 = por %p219, %p220
      %s223 = sadd.s32 %s222, 1
      %p226 = scmp.eq.s32.totalorder %s20, 1
      %p227 = scmp.ne.s32.totalorder %s222, %s224
      %p228 = scmp.eq.s32.totalorder %s20, 0
      %p229 = por %p227, %p228
      %p230 = scmp.ne.s32.totalorder %s222, %s224
      %p231 = scmp.eq.s32.totalorder %s25, 1
      %p232 = por %p230, %p231
      %p233 = scmp.ne.s32.totalorder %s224, %s225
      %p234 = scmp.eq.s32.totalorder %s25, 0
      %p235 = por %p233, %p234
      %p236 = scmp.ne.s32.totalorder %s224, %s225
      %p237 = scmp.eq.s32.totalorder %s26, 1
      %p238 = por %p236, %p237
      %p240 = scmp.ne.s32.totalorder %s225, %s239
      %p241 = scmp.eq.s32.totalorder %s26, 0
      %p242 = por %p240, %p241
      %s244 = sadd.s32 %s243, 1
      %p247 = scmp.eq.s32.totalorder %s20, 1
      %p248 = scmp.ne.s32.totalorder %s243, %s245
      %p249 = scmp.eq.s32.totalorder %s20, 0
      %p250 = por %p248, %p249
      %p251 = scmp.ne.s32.totalorder %s243, %s245
      %p252 = scmp.eq.s32.totalorder %s25, 1
      %p253 = por %p251, %p252
      %p254 = scmp.ne.s32.totalorder %s245, %s246
      %p255 = scmp.eq.s32.totalorder %s25, 0
      %p256 = por %p254, %p255
      %p257 = scmp.ne.s32.totalorder %s245, %s246
      %p258 = scmp.eq.s32.totalorder %s26, 1
      %p259 = por %p257, %p258
      %p261 = scmp.ne.s32.totalorder %s246, %s260
      %p262 = scmp.eq.s32.totalorder %s26, 0
      %p263 = por %p261, %p262
      %s264 = ssub.s32 %s20, %s27
      %p265 = scmp.eq.s32.totalorder %s264, 0
      %s267 = sadd.s32 %s266, 1
      %s268 = scalar_select %p265, %s266, %s267
      %p271 = pneg %p265
      %p272 = scmp.eq.s32.totalorder %s20, 1
      %p273 = por %p271, %p272
      %p274 = scmp.ne.s32.totalorder %s266, %s269
      %p275 = scmp.eq.s32.totalorder %s20, 0
      %p276 = por %p274, %p275
      %p277 = scmp.ne.s32.totalorder %s266, %s269
      %p278 = scmp.eq.s32.totalorder %s25, 1
      %p279 = por %p277, %p278
      %p280 = scmp.ne.s32.totalorder %s269, %s270
      %p281 = scmp.eq.s32.totalorder %s25, 0
      %p282 = por %p280, %p281
      %p283 = scmp.ne.s32.totalorder %s269, %s270
      %p284 = scmp.eq.s32.totalorder %s26, 1
      %p285 = por %p283, %p284
      %p287 = scmp.ne.s32.totalorder %s270, %s286
      %p288 = scmp.eq.s32.totalorder %s26, 0
      %p289 = por %p287, %p288
      %p290 = scmp.le.s32.totalorder 1, %s20
      %p291 = scmp.lt.s32.totalorder %s20, 3
      %p292 = pnand %p290, %p291
      %p293 = pneg %p292
      // Predicated region
      $region9: #{_forward_padded.1} parent=5 // pred_check
        _
      $region10: #{_forward_padded.1} parent=5 // pred_check_branch
        %295 = sbr.rel (%p292) target = $region12
      $region11: #{_forward_padded.1} parent=5 // pred_region
        %s296 = ssub.s32 %s20, 1
        // Predicated region
        $region13: #{_forward_padded.1} parent=11 // pred_check
          %p297 = pneg %p67
        $region14: #{_forward_padded.1} parent=11 // pred_check_branch
          %299 = sbr.rel (%p297) target = $region16
        $region15: #{_forward_padded.1} parent=11 // pred_region
          _
        $region16: #{_forward_padded.1} parent=11 // pred_fallthru
          _
        // Predicated region
        $region17: #{_forward_padded.1} parent=11 // pred_check
          %p300 = pneg %p88
        $region18: #{_forward_padded.1} parent=11 // pred_check_branch
          %302 = sbr.rel (%p300) target = $region20
        $region19: #{_forward_padded.1} parent=11 // pred_region
          _
        $region20: #{_forward_padded.1} parent=11 // pred_fallthru
          _
        // Predicated region
        $region21: #{_forward_padded.1} parent=11 // pred_check
          %p303 = pneg %p109
        $region22: #{_forward_padded.1} parent=11 // pred_check_branch
          %305 = sbr.rel (%p303) target = $region24
        $region23: #{_forward_padded.1} parent=11 // pred_region
          _
        $region24: #{_forward_padded.1} parent=11 // pred_fallthru
          _
        // Predicated region
        $region25: #{_forward_padded.1} parent=11 // pred_check
          %p306 = pneg %p130
        $region26: #{_forward_padded.1} parent=11 // pred_check_branch
          %308 = sbr.rel (%p306) target = $region28
        $region27: #{_forward_padded.1} parent=11 // pred_region
          _
        $region28: #{_forward_padded.1} parent=11 // pred_fallthru
          _
        // Predicated region
        $region29: #{_forward_padded.1} parent=11 // pred_check
          %p309 = pneg %p151
        $region30: #{_forward_padded.1} parent=11 // pred_check_branch
          %311 = sbr.rel (%p309) target = $region32
        $region31: #{_forward_padded.1} parent=11 // pred_region
          _
        $region32: #{_forward_padded.1} parent=11 // pred_fallthru
          _
        // Predicated region
        $region33: #{_forward_padded.1} parent=11 // pred_check
          %p312 = pneg %p172
        $region34: #{_forward_padded.1} parent=11 // pred_check_branch
          %314 = sbr.rel (%p312) target = $region36
        $region35: #{_forward_padded.1} parent=11 // pred_region
          _
        $region36: #{_forward_padded.1} parent=11 // pred_fallthru
          _
        // Predicated region
        $region37: #{_forward_padded.1} parent=11 // pred_check
          %p315 = pneg %p193
        $region38: #{_forward_padded.1} parent=11 // pred_check_branch
          %317 = sbr.rel (%p315) target = $region40
        $region39: #{_forward_padded.1} parent=11 // pred_region
          _
        $region40: #{_forward_padded.1} parent=11 // pred_fallthru
          _
        // Predicated region
        $region41: #{_forward_padded.1} parent=11 // pred_check
          %p318 = pneg %p214
        $region42: #{_forward_padded.1} parent=11 // pred_check_branch
          %320 = sbr.rel (%p318) target = $region44
        $region43: #{_forward_padded.1} parent=11 // pred_region
          _
        $region44: #{_forward_padded.1} parent=11 // pred_fallthru
          _
        // Predicated region
        $region45: #{_forward_padded.1} parent=11 // pred_check
          %p321 = pneg %p235
        $region46: #{_forward_padded.1} parent=11 // pred_check_branch
          %323 = sbr.rel (%p321) target = $region48
        $region47: #{_forward_padded.1} parent=11 // pred_region
          _
        $region48: #{_forward_padded.1} parent=11 // pred_fallthru
          _
        // Predicated region
        $region49: #{_forward_padded.1} parent=11 // pred_check
          %p324 = pneg %p256
        $region50: #{_forward_padded.1} parent=11 // pred_check_branch
          %326 = sbr.rel (%p324) target = $region52
        $region51: #{_forward_padded.1} parent=11 // pred_region
          _
        $region52: #{_forward_padded.1} parent=11 // pred_fallthru
          _
      $region12: #{_forward_padded.1} parent=5 // pred_fallthru
        _
      %p327 = scmp.lt.s32.totalorder %s20, 2
      // Predicated region
      $region53: #{_forward_padded.1} parent=5 // pred_check
        %p328 = pneg %p327
      $region54: #{_forward_padded.1} parent=5 // pred_check_branch
        %330 = sbr.rel (%p328) target = $region56
      $region55: #{_forward_padded.1} parent=5 // pred_region
        // Predicated region
        $region57: #{_forward_padded.1} parent=55 // pred_check
          %p331 = pneg %p40
        $region58: #{_forward_padded.1} parent=55 // pred_check_branch
          %333 = sbr.rel (%p331) target = $region60
        $region59: #{_forward_padded.1} parent=55 // pred_region
          %p334 = scmp.lt.s32.totalorder %s20, 1
          %s335 = scalar_select %p334, %s20, 1
          %s336 = smul.addr %s335, 3
          %s337 = smul.addr %s336, 8
          %s338 = scalar_lea.vmem %s0, %s337
        $region60: #{_forward_padded.1} parent=55 // pred_fallthru
          _
      $region56: #{_forward_padded.1} parent=5 // pred_fallthru
        _
      %p339 = scmp.le.s32.totalorder 1, %s20
      %p340 = scmp.lt.s32.totalorder %s20, 3
      %p341 = pnand %p339, %p340
      %p342 = pneg %p341
      // Predicated region
      $region61: #{_forward_padded.1} parent=5 // pred_check
        _
      $region62: #{_forward_padded.1} parent=5 // pred_check_branch
        %344 = sbr.rel (%p341) target = $region64
      $region63: #{_forward_padded.1} parent=5 // pred_region
        %s345 = ssub.s32 %s20, 1
        %p346 = scmp.lt.s32.totalorder %s25, 1
        %s347 = scalar_select %p346, %s25, 1
        %s348 = smul.addr %s347, 3
        %s349 = smul.addr %s348, 8
        %s350 = scalar_lea.vmem %s0, %s349
        %p351 = pneg %p46
        %p352 = pneg %p43
        %p353 = pneg %p67
        %p354 = pneg %p64
        %p355 = pneg %p88
        %p356 = pneg %p85
        %p357 = pneg %p109
        %p358 = pneg %p106
        %p359 = pneg %p130
        %p360 = pneg %p127
        %p361 = pneg %p151
        %p362 = pneg %p148
        %p363 = pneg %p172
        %p364 = pneg %p169
        %p365 = pneg %p193
        %p366 = pneg %p190
        %p367 = pneg %p214
        %p368 = pneg %p211
        %p369 = pneg %p235
        %p370 = pneg %p232
        %p371 = pneg %p256
        %p372 = pneg %p253
        %p373 = pneg %p282
        %p374 = pneg %p279
        %s375 = sand.u32 %s269, 1
        %s376 = scalar_lea.sflag [#allocation5], %s375
        %s377 = sand.u32 %s269, 1
        %s378 = scalar_lea.vmem [#allocation4], %s377
        %p379 = scmp.lt.s32.totalorder %s25, 1
        %s380 = scalar_select %p379, %s25, 1
        %s381 = smul.addr %s380, 3
        %s382 = smul.addr %s381, 8
        %s383 = scalar_lea.vmem %s0, %s382
        %v385 = vld [vmem:[%s383] ss:$2 sm:$0xff]
        %s386 = scalar_lea.vmem %s383, 1
        %v387 = vld [vmem:[%s386] ss:$2 sm:$0xff]
        %s388 = scalar_lea.vmem %s383, 2
        %v389 = vld [vmem:[%s388] ss:$2 sm:$0xff]
        %s390 = scalar_lea.vmem %s383, 3
        %v391 = vld [vmem:[%s390] ss:$2 sm:$0xff]
        %393 = vrot.lane.b32.xlu0 %v387, 48
        %v394 = vpop.permute.xlu0 %393
        %397 = vrot.lane.b32.xlu0 %v389, 96
        %v398 = vpop.permute.xlu0 %397
        %401 = vrot.lane.b32.xlu0 %v391, 16
        %v402 = vpop.permute.xlu0 %401
        %vm404 = vcmask 392192
        %v405 = vsel %vm404, %v385, %v394
        %vm406 = vcmask 785408
        %v407 = vsel %vm406, %v405, %v398
        %vm408 = vcmask 130048
        %v409 = vsel %vm408, %v398, %v402
        %v410 = vpack.c.bf16 %v407, %v407
        %v411 = vpack.c.bf16 %v409, %v409
        %v412 = vld [vmem:[%s1] sm:$0xf]
        %v413 = vld [vmem:[%s1 + $0x4] sm:$0xf]
        %v414 = vld [vmem:[%s1 + $0x8] sm:$0xf]
        %v415 = vld [vmem:[%s1 + $0xc] sm:$0xf]
        %v416 = vld [vmem:[%s1 + $0x10] sm:$0xf]
        %v417 = vld [vmem:[%s1 + $0x14] sm:$0xf]
        %v418 = vld [vmem:[%s1 + $0x18] sm:$0xf]
        %v419 = vld [vmem:[%s1 + $0x1c] sm:$0xf]
        %v420 = vld [vmem:[%s1 + $0x20] sm:$0xf]
        %v421 = vld [vmem:[%s1 + $0x24] sm:$0xf]
        %v422 = vld [vmem:[%s1 + $0x28] sm:$0xf]
        %v423 = vld [vmem:[%s1 + $0x2c] sm:$0xf]
        %v424 = vld [vmem:[%s1 + $0x30] sm:$0xf]
        %v425 = vld [vmem:[%s1 + $0x34] sm:$0xf]
        %v426 = vld [vmem:[%s1 + $0x38] sm:$0xf]
        %v427 = vld [vmem:[%s1 + $0x3c] sm:$0xf]
        %v428 = vld [vmem:[%s1 + $0x40] sm:$0xf]
        %v429 = vld [vmem:[%s1 + $0x44] sm:$0xf]
        %v430 = vld [vmem:[%s1 + $0x48] sm:$0xf]
        %v431 = vld [vmem:[%s1 + $0x4c] sm:$0xf]
        %v432 = vld [vmem:[%s1 + $0x50] sm:$0xf]
        %v433 = vld [vmem:[%s1 + $0x54] sm:$0xf]
        %v434 = vld [vmem:[%s1 + $0x58] sm:$0xf]
        %v435 = vld [vmem:[%s1 + $0x5c] sm:$0xf]
        %v460 = vunpack.c.l.b16 %v412
        %v461 = vunpack.c.l.b16 %v413
        %v462 = vunpack.c.l.b16 %v414
        %v463 = vunpack.c.l.b16 %v415
        %v464 = vunpack.c.l.b16 %v416
        %v465 = vunpack.c.l.b16 %v417
        %v466 = vunpack.c.l.b16 %v418
        %v467 = vunpack.c.l.b16 %v419
        %v468 = vunpack.c.l.b16 %v420
        %v469 = vunpack.c.l.b16 %v421
        %v470 = vunpack.c.l.b16 %v422
        %v471 = vunpack.c.l.b16 %v423
        %v472 = vunpack.c.l.b16 %v424
        %v473 = vunpack.c.l.b16 %v425
        %v474 = vunpack.c.l.b16 %v426
        %v475 = vunpack.c.l.b16 %v427
        %v476 = vunpack.c.l.b16 %v428
        %v477 = vunpack.c.l.b16 %v429
        %v478 = vunpack.c.l.b16 %v430
        %v479 = vunpack.c.l.b16 %v431
        %v480 = vunpack.c.l.b16 %v432
        %v481 = vunpack.c.l.b16 %v433
        %v482 = vunpack.c.l.b16 %v434
        %v483 = vunpack.c.l.b16 %v435
        %v484 = vpack.c.b16 %v461, %v460
        %v485 = vpack.c.b16 %v463, %v462
        %v486 = vpack.c.b16 %v465, %v464
        %v487 = vpack.c.b16 %v467, %v466
        %v488 = vpack.c.b16 %v469, %v468
        %v489 = vpack.c.b16 %v471, %v470
        %v490 = vpack.c.b16 %v473, %v472
        %v491 = vpack.c.b16 %v475, %v474
        %v492 = vpack.c.b16 %v477, %v476
        %v493 = vpack.c.b16 %v479, %v478
        %v494 = vpack.c.b16 %v481, %v480
        %v495 = vpack.c.b16 %v483, %v482
        %vm508 = vcmask 523264
        %v510 = vsel %vm508, %v411, 0
        %512 = vmatprep.subr.bf16.mxu0 0
        %513 = vmatpush1.bf16.msra.mxu0 %v484
        %514 = vmatprep.subr.bf16.mxu0 0
        %515 = vmatpush1.bf16.msra.mxu0 %v485
        %516 = vmatprep.subr.bf16.mxu0 0
        %517 = vmatpush1.bf16.msra.mxu0 %v486
        %518 = vmatprep.subr.bf16.mxu0 0
        %519 = vmatpush1.bf16.msra.mxu0 %v487
        %520 = vmatprep.subr.bf16.mxu0 0
        %521 = vmatpush1.bf16.msra.mxu0 %v488
        %522 = vmatprep.subr.bf16.mxu0 0
        %523 = vmatpush1.bf16.msra.mxu0 %v489
        %524 = vmatprep.subr.bf16.mxu0 0
        %525 = vmatpush1.bf16.msra.mxu0 %v490
        %526 = vmatprep.subr.bf16.mxu0 0
        %527 = vmatpush1.bf16.msra.mxu0 %v491
        %528 = vmatprep.subr.bf16.mxu0 0
        %529 = vmatpush1.bf16.msra.mxu0 %v492
        %530 = vmatprep.subr.bf16.mxu0 0
        %531 = vmatpush1.bf16.msra.mxu0 %v493
        %532 = vmatprep.subr.bf16.mxu0 0
        %533 = vmatpush1.bf16.msra.mxu0 %v494
        %534 = vmatprep.subr.bf16.mxu0 0
        %535 = vmatpush1.bf16.msra.mxu0 %v495
        %536 = vmatprep.subr.bf16.mxu0 0
        %537 = vmatpush1.bf16.msra.mxu0 0
        %538 = vmatprep.subr.bf16.mxu0 0
        %539 = vmatpush1.bf16.msra.mxu0 0
        %540 = vmatprep.subr.bf16.mxu0 0
        %541 = vmatpush1.bf16.msra.mxu0 0
        %542 = vmatprep.subr.bf16.mxu0 0
        %543 = vmatpush1.bf16.msra.mxu0 0
        %544 = vmatprep.mubr.bf16.mxu0 %v510
        %545 = vmatmul.mubr.bf16.gmra.mrb[0].mxu0 %v410
        %v546 = vpop.f32.mrb[0].mxu0
        %v547 = vadd.f32 0.0, %v546
        %v548 = vpop.f32.mrb[0].mxu0
        %v549 = vpop.f32.mrb[0].mxu0
        %v550 = vpop.f32.mrb[0].mxu0
        %551 = vdwg.mxu0
        %v552 = vsel %vm508, %v547, 0.0
        %v553 = vrot.slane %v552, 4
        %v554 = vadd.f32 %v552, %v553
        %v555 = vrot.slane %v554, 2
        %v556 = vadd.f32 %v554, %v555
        %v557 = vrot.slane %v556, 1
        %v558 = vadd.f32 %v556, %v557
        %v559 = vmul.f32 %v547, %v547
        %v560 = vsel %vm508, %v559, 0.0
        %v561 = vrot.slane %v560, 4
        %v562 = vadd.f32 %v560, %v561
        %v563 = vrot.slane %v562, 2
        %v564 = vadd.f32 %v562, %v563
        %v565 = vrot.slane %v564, 1
        %v566 = vadd.f32 %v564, %v565
        %vm567 = vcmask 1040384
        %v568 = vsel %vm567, %v558, %v566
        %v569 = vld [vmem:[%s2] sm:$0xff]
        %v570 = vld [vmem:[%s2 + $0x8] sm:$0xff]
        %v571 = vld [vmem:[%s2 + $0x10] sm:$0xff]
        %v572 = vld [vmem:[%s2 + $0x18] sm:$0xff]
        %v573 = vld [vmem:[%s2 + $0x20] sm:$0xff]
        %v574 = vld [vmem:[%s2 + $0x28] sm:$0xff]
        %v575 = vld [vmem:[%s2 + $0x30] sm:$0xff]
        %v576 = vld [vmem:[%s2 + $0x38] sm:$0xff]
        %v578 = vsel %vm508, %v568, 0
        %580 = vmatprep.subr.mxu0 0.0
        %581 = vmatpush1.msra.mxu0 %v569
        %582 = vmatprep.subr.mxu0 0.0
        %583 = vmatpush1.msra.mxu0 %v570
        %584 = vmatprep.subr.mxu0 0.0
        %585 = vmatpush1.msra.mxu0 %v571
        %586 = vmatprep.subr.mxu0 0.0
        %587 = vmatpush1.msra.mxu0 %v572
        %588 = vmatprep.subr.mxu0 0.0
        %589 = vmatpush1.msra.mxu0 %v573
        %590 = vmatprep.subr.mxu0 0.0
        %591 = vmatpush1.msra.mxu0 %v574
        %592 = vmatprep.subr.mxu0 0.0
        %593 = vmatpush1.msra.mxu0 %v575
        %594 = vmatprep.subr.mxu0 0.0
        %595 = vmatpush1.msra.mxu0 %v576
        %596 = vmatprep.subr.mxu0 0.0
        %597 = vmatpush1.msra.mxu0 0.0
        %598 = vmatprep.subr.mxu0 0.0
        %599 = vmatpush1.msra.mxu0 0.0
        %600 = vmatprep.subr.mxu0 0.0
        %601 = vmatpush1.msra.mxu0 0.0
        %602 = vmatprep.subr.mxu0 0.0
        %603 = vmatpush1.msra.mxu0 0.0
        %604 = vmatprep.subr.mxu0 0.0
        %605 = vmatpush1.msra.mxu0 0.0
        %606 = vmatprep.subr.mxu0 0.0
        %607 = vmatpush1.msra.mxu0 0.0
        %608 = vmatprep.subr.mxu0 0.0
        %609 = vmatpush1.msra.mxu0 0.0
        %610 = vmatprep.subr.mxu0 0.0
        %611 = vmatpush1.msra.mxu0 0.0
        %612 = vmatprep.subr.mxu0 0.0
        %613 = vmatpush1.msra.mxu0 0.0
        %614 = vmatprep.subr.mxu0 0.0
        %615 = vmatpush1.msra.mxu0 0.0
        %616 = vmatprep.subr.mxu0 0.0
        %617 = vmatpush1.msra.mxu0 0.0
        %618 = vmatprep.subr.mxu0 0.0
        %619 = vmatpush1.msra.mxu0 0.0
        %620 = vmatprep.subr.mxu0 0.0
        %621 = vmatpush1.msra.mxu0 0.0
        %622 = vmatprep.subr.mxu0 0.0
        %623 = vmatpush1.msra.mxu0 0.0
        %624 = vmatprep.subr.mxu0 0.0
        %625 = vmatpush1.msra.mxu0 0.0
        %626 = vmatprep.subr.mxu0 0.0
        %627 = vmatpush1.msra.mxu0 0.0
        %628 = vmatprep.subr.mxu0 0.0
        %629 = vmatpush1.msra.mxu0 0.0
        %630 = vmatprep.subr.mxu0 0.0
        %631 = vmatpush1.msra.mxu0 0.0
        %632 = vmatprep.subr.mxu0 0.0
        %633 = vmatpush1.msra.mxu0 0.0
        %634 = vmatprep.subr.mxu0 0.0
        %635 = vmatpush1.msra.mxu0 0.0
        %636 = vmatprep.subr.mxu0 0.0
        %637 = vmatpush1.msra.mxu0 0.0
        %638 = vmatprep.subr.mxu0 0.0
        %639 = vmatpush1.msra.mxu0 0.0
        %640 = vmatprep.subr.mxu0 0.0
        %641 = vmatpush1.msra.mxu0 0.0
        %642 = vmatprep.subr.mxu0 0.0
        %643 = vmatpush1.msra.mxu0 0.0
        %644 = vmatprep.mubr.f32.mxu0 0.0
        %645 = vmatmul.mubr.f32.gmra.mrb[0].mxu0 %v578
        %v646 = vpop.f32.mrb[0].mxu0
        %v647 = vadd.f32 0.0, %v646
        %v648 = vpop.f32.mrb[0].mxu0
        %649 = vdwg.mxu0
        %v650 = vmul.f32 %v647, 0.015625
        %v651 = vmul.f32 %v650, %v650
        %v653 = vrot.slane %v651, 7
        %v655 = vsub.f32 %v650, %v653
        %v656 = vadd.f32 %v655, 1e-05
        %v657 = vrsqrt.pop %v656
        %v658 = vsub.f32 0.0, %v650
        %v660 = vrot.slane %v657, 1
        %v662 = vmul.f32 %v658, %v660
        %663 = vrot.lane.b32.xlu0 %v657, 8
        %v664 = vpop.permute.xlu0 %663
        %666 = vrot.lane.b32.xlu0 %v657, 16
        %v667 = vpop.permute.xlu0 %666
        %669 = vrot.lane.b32.xlu0 %v657, 24
        %v670 = vpop.permute.xlu0 %669
        %672 = vrot.lane.b32.xlu0 %v657, 32
        %v673 = vpop.permute.xlu0 %672
        %675 = vrot.lane.b32.xlu0 %v657, 40
        %v676 = vpop.permute.xlu0 %675
        %678 = vrot.lane.b32.xlu0 %v657, 48
        %v679 = vpop.permute.xlu0 %678
        %681 = vrot.lane.b32.xlu0 %v657, 56
        %v682 = vpop.permute.xlu0 %681
        %vm684 = vcmask 64512
        %v685 = vsel %vm684, %v657, %v664
        %v686 = vsel %vm408, %v685, %v667
        %vm687 = vcmask 195584
        %v688 = vsel %vm687, %v686, %v670
        %vm689 = vcmask 261120
        %v690 = vsel %vm689, %v688, %v673
        %vm691 = vcmask 326656
        %v692 = vsel %vm691, %v690, %v676
        %v693 = vsel %vm404, %v692, %v679
        %vm694 = vcmask 457728
        %v695 = vsel %vm694, %v693, %v682
        %697 = vrot.lane.b32.xlu0 %v662, 8
        %v698 = vpop.permute.xlu0 %697
        %700 = vrot.lane.b32.xlu0 %v662, 16
        %v701 = vpop.permute.xlu0 %700
        %703 = vrot.lane.b32.xlu0 %v662, 24
        %v704 = vpop.permute.xlu0 %703
        %706 = vrot.lane.b32.xlu0 %v662, 32
        %v707 = vpop.permute.xlu0 %706
        %709 = vrot.lane.b32.xlu0 %v662, 40
        %v710 = vpop.permute.xlu0 %709
        %712 = vrot.lane.b32.xlu0 %v662, 48
        %v713 = vpop.permute.xlu0 %712
        %715 = vrot.lane.b32.xlu0 %v662, 56
        %v716 = vpop.permute.xlu0 %715
        %v718 = vsel %vm684, %v662, %v698
        %v719 = vsel %vm408, %v718, %v701
        %v720 = vsel %vm687, %v719, %v704
        %v721 = vsel %vm689, %v720, %v707
        %v722 = vsel %vm691, %v721, %v710
        %v723 = vsel %vm404, %v722, %v713
        %v724 = vsel %vm694, %v723, %v716
        %v725 = vlaneseq
        %v726 = vshrl.u32 %v725, 7
        %v727 = vsub.s32 1, %v726
        %v728 = vrot.slane %v695, %v727
        %v729 = vmul.f32 %v547, %v728
        %v730 = vlaneseq
        %v731 = vshrl.u32 %v730, 7
        %v732 = vsub.s32 0, %v731
        %v733 = vrot.slane %v724, %v732
        %v734 = vadd.f32 %v729, %v733
        %vm735 = vcmp.gt.f32.partialorder %v734, 0.0
        %v736 = vmul.f32 %v734, 0.01
        %v737 = vsel %vm735, %v734, %v736
        %vm738 = vcmask 516096
        %739 = vst.msk [vmem:[#allocation2] sm:$0x1] %vm738, 0.0
        %740 = vst.msk [vmem:[#allocation2 + $0x9] sm:$0x1] %vm738, 0.0
        %741 = vst.msk [vmem:[#allocation2 + $0x1] sm:$0xff] %vm508, %v737
        %v742 = vld [vmem:[#allocation2] ss:$2 sm:$0xf]
        %s743 = scalar_lea.vmem [#allocation2], 1
        %v744 = vld [vmem:[%s743] ss:$2 sm:$0xf]
        %s745 = scalar_lea.vmem [#allocation2], 2
        %v746 = vld [vmem:[%s745] ss:$2 sm:$0xf]
        %s747 = scalar_lea.vmem [#allocation2], 3
        %v748 = vld [vmem:[%s747] ss:$2 sm:$0xf]
        %750 = vrot.lane.b32.xlu0 %v744, 64
        %v751 = vpop.permute.xlu0 %750
        %754 = vrot.lane.b32.xlu0 %v748, 64
        %v755 = vpop.permute.xlu0 %754
        %v757 = vsel %vm508, %v742, %v751
        %v758 = vsel %vm508, %v746, %v755
        %v759 = vpack.c.bf16 %v757, %v757
        %v760 = vpack.c.bf16 %v758, %v758
        %v761 = vld [vmem:[%s3] sm:$0xf]
        %v762 = vld [vmem:[%s3 + $0x4] sm:$0xf]
        %v763 = vld [vmem:[%s3 + $0x8] sm:$0xf]
        %v764 = vld [vmem:[%s3 + $0xc] sm:$0xf]
        %v765 = vld [vmem:[%s3 + $0x10] sm:$0xf]
        %v766 = vld [vmem:[%s3 + $0x14] sm:$0xf]
        %v767 = vld [vmem:[%s3 + $0x18] sm:$0xf]
        %v768 = vld [vmem:[%s3 + $0x1c] sm:$0xf]
        %v769 = vld [vmem:[%s3 + $0x20] sm:$0xf]
        %v770 = vld [vmem:[%s3 + $0x24] sm:$0xf]
        %v771 = vld [vmem:[%s3 + $0x28] sm:$0xf]
        %v772 = vld [vmem:[%s3 + $0x2c] sm:$0xf]
        %v773 = vld [vmem:[%s3 + $0x30] sm:$0xf]
        %v774 = vld [vmem:[%s3 + $0x34] sm:$0xf]
        %v775 = vld [vmem:[%s3 + $0x38] sm:$0xf]
        %v776 = vld [vmem:[%s3 + $0x3c] sm:$0xf]
        %v777 = vld [vmem:[%s3 + $0x40] sm:$0xf]
        %v778 = vld [vmem:[%s3 + $0x44] sm:$0xf]
        %v779 = vld [vmem:[%s3 + $0x48] sm:$0xf]
        %v780 = vld [vmem:[%s3 + $0x4c] sm:$0xf]
        %v781 = vld [vmem:[%s3 + $0x50] sm:$0xf]
        %v782 = vld [vmem:[%s3 + $0x54] sm:$0xf]
        %v783 = vld [vmem:[%s3 + $0x58] sm:$0xf]
        %v784 = vld [vmem:[%s3 + $0x5c] sm:$0xf]
        %v785 = vld [vmem:[%s3 + $0x60] sm:$0xf]
        %v786 = vld [vmem:[%s3 + $0x64] sm:$0xf]
        %v787 = vld [vmem:[%s3 + $0x68] sm:$0xf]
        %v788 = vld [vmem:[%s3 + $0x6c] sm:$0xf]
        %v789 = vld [vmem:[%s3 + $0x70] sm:$0xf]
        %v790 = vld [vmem:[%s3 + $0x74] sm:$0xf]
        %v791 = vld [vmem:[%s3 + $0x78] sm:$0xf]
        %v792 = vld [vmem:[%s3 + $0x7c] sm:$0xf]
        %v825 = vunpack.c.l.b16 %v761
        %v826 = vunpack.c.l.b16 %v762
        %v827 = vunpack.c.l.b16 %v763
        %v828 = vunpack.c.l.b16 %v764
        %v829 = vunpack.c.l.b16 %v765
        %v830 = vunpack.c.l.b16 %v766
        %v831 = vunpack.c.l.b16 %v767
        %v832 = vunpack.c.l.b16 %v768
        %v833 = vunpack.c.l.b16 %v769
        %v834 = vunpack.c.l.b16 %v770
        %v835 = vunpack.c.l.b16 %v771
        %v836 = vunpack.c.l.b16 %v772
        %v837 = vunpack.c.l.b16 %v773
        %v838 = vunpack.c.l.b16 %v774
        %v839 = vunpack.c.l.b16 %v775
        %v840 = vunpack.c.l.b16 %v776
        %v841 = vunpack.c.l.b16 %v777
        %v842 = vunpack.c.l.b16 %v778
        %v843 = vunpack.c.l.b16 %v779
        %v844 = vunpack.c.l.b16 %v780
        %v845 = vunpack.c.l.b16 %v781
        %v846 = vunpack.c.l.b16 %v782
        %v847 = vunpack.c.l.b16 %v783
        %v848 = vunpack.c.l.b16 %v784
        %v849 = vunpack.c.l.b16 %v785
        %v850 = vunpack.c.l.b16 %v786
        %v851 = vunpack.c.l.b16 %v787
        %v852 = vunpack.c.l.b16 %v788
        %v853 = vunpack.c.l.b16 %v789
        %v854 = vunpack.c.l.b16 %v790
        %v855 = vunpack.c.l.b16 %v791
        %v856 = vunpack.c.l.b16 %v792
        %v857 = vpack.c.b16 %v826, %v825
        %v858 = vpack.c.b16 %v828, %v827
        %v859 = vpack.c.b16 %v830, %v829
        %v860 = vpack.c.b16 %v832, %v831
        %v861 = vpack.c.b16 %v834, %v833
        %v862 = vpack.c.b16 %v836, %v835
        %v863 = vpack.c.b16 %v838, %v837
        %v864 = vpack.c.b16 %v840, %v839
        %v865 = vpack.c.b16 %v842, %v841
        %v866 = vpack.c.b16 %v844, %v843
        %v867 = vpack.c.b16 %v846, %v845
        %v868 = vpack.c.b16 %v848, %v847
        %v869 = vpack.c.b16 %v850, %v849
        %v870 = vpack.c.b16 %v852, %v851
        %v871 = vpack.c.b16 %v854, %v853
        %v872 = vpack.c.b16 %v856, %v855
        %889 = vmatprep.subr.bf16.mxu0 0
        %890 = vmatpush1.bf16.msra.mxu0 %v857
        %891 = vmatprep.subr.bf16.mxu0 0
        %892 = vmatpush1.bf16.msra.mxu0 %v858
        %893 = vmatprep.subr.bf16.mxu0 0
        %894 = vmatpush1.bf16.msra.mxu0 %v859
        %895 = vmatprep.subr.bf16.mxu0 0
        %896 = vmatpush1.bf16.msra.mxu0 %v860
        %897 = vmatprep.subr.bf16.mxu0 0
        %898 = vmatpush1.bf16.msra.mxu0 %v861
        %899 = vmatprep.subr.bf16.mxu0 0
        %900 = vmatpush1.bf16.msra.mxu0 %v862
        %901 = vmatprep.subr.bf16.mxu0 0
        %902 = vmatpush1.bf16.msra.mxu0 %v863
        %903 = vmatprep.subr.bf16.mxu0 0
        %904 = vmatpush1.bf16.msra.mxu0 %v864
        %905 = vmatprep.subr.bf16.mxu0 0
        %906 = vmatpush1.bf16.msra.mxu0 %v865
        %907 = vmatprep.subr.bf16.mxu0 0
        %908 = vmatpush1.bf16.msra.mxu0 %v866
        %909 = vmatprep.subr.bf16.mxu0 0
        %910 = vmatpush1.bf16.msra.mxu0 %v867
        %911 = vmatprep.subr.bf16.mxu0 0
        %912 = vmatpush1.bf16.msra.mxu0 %v868
        %913 = vmatprep.subr.bf16.mxu0 0
        %914 = vmatpush1.bf16.msra.mxu0 %v869
        %915 = vmatprep.subr.bf16.mxu0 0
        %916 = vmatpush1.bf16.msra.mxu0 %v870
        %917 = vmatprep.subr.bf16.mxu0 0
        %918 = vmatpush1.bf16.msra.mxu0 %v871
        %919 = vmatprep.subr.bf16.mxu0 0
        %920 = vmatpush1.bf16.msra.mxu0 %v872
        %921 = vmatprep.mubr.bf16.mxu0 %v760
        %922 = vmatmul.mubr.bf16.gmra.mrb[0].mxu0 %v759
        %v923 = vpop.f32.mrb[0].mxu0
        %v924 = vadd.f32 0.0, %v923
        %v925 = vpop.f32.mrb[0].mxu0
        %v926 = vpop.f32.mrb[0].mxu0
        %v927 = vpop.f32.mrb[0].mxu0
        %928 = vdwg.mxu0
        %vm929 = vcmask 519168
        %v930 = vsel %vm929, %v924, 0.0
        %v931 = vrot.slane %v930, 4
        %v932 = vadd.f32 %v930, %v931
        %v933 = vrot.slane %v932, 2
        %v934 = vadd.f32 %v932, %v933
        %v935 = vrot.slane %v934, 1
        %v936 = vadd.f32 %v934, %v935
        %v937 = vmul.f32 %v924, %v924
        %v938 = vsel %vm929, %v937, 0.0
        %v939 = vrot.slane %v938, 4
        %v940 = vadd.f32 %v938, %v939
        %v941 = vrot.slane %v940, 2
        %v942 = vadd.f32 %v940, %v941
        %v943 = vrot.slane %v942, 1
        %v944 = vadd.f32 %v942, %v943
        %v945 = vsel %vm567, %v936, %v944
        %v946 = vld [vmem:[%s4] sm:$0xff]
        %v947 = vld [vmem:[%s4 + $0x8] sm:$0xff]
        %v948 = vld [vmem:[%s4 + $0x10] sm:$0xff]
        %v949 = vld [vmem:[%s4 + $0x18] sm:$0xff]
        %v950 = vld [vmem:[%s4 + $0x20] sm:$0xff]
        %v951 = vld [vmem:[%s4 + $0x28] sm:$0xff]
        %v952 = vld [vmem:[%s4 + $0x30] sm:$0xff]
        %v953 = vld [vmem:[%s4 + $0x38] sm:$0xff]
        %v955 = vsel %vm508, %v945, 0
        %957 = vmatprep.subr.mxu0 0.0
        %958 = vmatpush1.msra.mxu0 %v946
        %959 = vmatprep.subr.mxu0 0.0
        %960 = vmatpush1.msra.mxu0 %v947
        %961 = vmatprep.subr.mxu0 0.0
        %962 = vmatpush1.msra.mxu0 %v948
        %963 = vmatprep.subr.mxu0 0.0
        %964 = vmatpush1.msra.mxu0 %v949
        %965 = vmatprep.subr.mxu0 0.0
        %966 = vmatpush1.msra.mxu0 %v950
        %967 = vmatprep.subr.mxu0 0.0
        %968 = vmatpush1.msra.mxu0 %v951
        %969 = vmatprep.subr.mxu0 0.0
        %970 = vmatpush1.msra.mxu0 %v952
        %971 = vmatprep.subr.mxu0 0.0
        %972 = vmatpush1.msra.mxu0 %v953
        %973 = vmatprep.subr.mxu0 0.0
        %974 = vmatpush1.msra.mxu0 0.0
        %975 = vmatprep.subr.mxu0 0.0
        %976 = vmatpush1.msra.mxu0 0.0
        %977 = vmatprep.subr.mxu0 0.0
        %978 = vmatpush1.msra.mxu0 0.0
        %979 = vmatprep.subr.mxu0 0.0
        %980 = vmatpush1.msra.mxu0 0.0
        %981 = vmatprep.subr.mxu0 0.0
        %982 = vmatpush1.msra.mxu0 0.0
        %983 = vmatprep.subr.mxu0 0.0
        %984 = vmatpush1.msra.mxu0 0.0
        %985 = vmatprep.subr.mxu0 0.0
        %986 = vmatpush1.msra.mxu0 0.0
        %987 = vmatprep.subr.mxu0 0.0
        %988 = vmatpush1.msra.mxu0 0.0
        %989 = vmatprep.subr.mxu0 0.0
        %990 = vmatpush1.msra.mxu0 0.0
        %991 = vmatprep.subr.mxu0 0.0
        %992 = vmatpush1.msra.mxu0 0.0
        %993 = vmatprep.subr.mxu0 0.0
        %994 = vmatpush1.msra.mxu0 0.0
        %995 = vmatprep.subr.mxu0 0.0
        %996 = vmatpush1.msra.mxu0 0.0
        %997 = vmatprep.subr.mxu0 0.0
        %998 = vmatpush1.msra.mxu0 0.0
        %999 = vmatprep.subr.mxu0 0.0
        %1000 = vmatpush1.msra.mxu0 0.0
        %1001 = vmatprep.subr.mxu0 0.0
        %1002 = vmatpush1.msra.mxu0 0.0
        %1003 = vmatprep.subr.mxu0 0.0
        %1004 = vmatpush1.msra.mxu0 0.0
        %1005 = vmatprep.subr.mxu0 0.0
        %1006 = vmatpush1.msra.mxu0 0.0
        %1007 = vmatprep.subr.mxu0 0.0
        %1008 = vmatpush1.msra.mxu0 0.0
        %1009 = vmatprep.subr.mxu0 0.0
        %1010 = vmatpush1.msra.mxu0 0.0
        %1011 = vmatprep.subr.mxu0 0.0
        %1012 = vmatpush1.msra.mxu0 0.0
        %1013 = vmatprep.subr.mxu0 0.0
        %1014 = vmatpush1.msra.mxu0 0.0
        %1015 = vmatprep.subr.mxu0 0.0
        %1016 = vmatpush1.msra.mxu0 0.0
        %1017 = vmatprep.subr.mxu0 0.0
        %1018 = vmatpush1.msra.mxu0 0.0
        %1019 = vmatprep.subr.mxu0 0.0
        %1020 = vmatpush1.msra.mxu0 0.0
        %1021 = vmatprep.mubr.f32.mxu0 0.0
        %1022 = vmatmul.mubr.f32.gmra.mrb[0].mxu0 %v955
        %v1023 = vpop.f32.mrb[0].mxu0
        %v1024 = vadd.f32 0.0, %v1023
        %v1025 = vpop.f32.mrb[0].mxu0
        %1026 = vdwg.mxu0
        %v1027 = vmul.f32 %v1024, 0.0625
        %v1028 = vmul.f32 %v1027, %v1027
        %v1030 = vrot.slane %v1028, 7
        %v1032 = vsub.f32 %v1027, %v1030
        %v1033 = vadd.f32 %v1032, 1e-05
        %v1034 = vrsqrt.pop %v1033
        %v1035 = vsub.f32 0.0, %v1027
        %v1037 = vrot.slane %v1034, 1
        %v1039 = vmul.f32 %v1035, %v1037
        %1040 = vrot.lane.b32.xlu0 %v1034, 16
        %v1041 = vpop.permute.xlu0 %1040
        %1043 = vrot.lane.b32.xlu0 %v1034, 32
        %v1044 = vpop.permute.xlu0 %1043
        %1046 = vrot.lane.b32.xlu0 %v1034, 48
        %v1047 = vpop.permute.xlu0 %1046
        %v1049 = vsel %vm408, %v1034, %v1041
        %v1050 = vsel %vm689, %v1049, %v1044
        %v1051 = vsel %vm404, %v1050, %v1047
        %1053 = vrot.lane.b32.xlu0 %v1039, 16
        %v1054 = vpop.permute.xlu0 %1053
        %1056 = vrot.lane.b32.xlu0 %v1039, 32
        %v1057 = vpop.permute.xlu0 %1056
        %1059 = vrot.lane.b32.xlu0 %v1039, 48
        %v1060 = vpop.permute.xlu0 %1059
        %v1062 = vsel %vm408, %v1039, %v1054
        %v1063 = vsel %vm689, %v1062, %v1057
        %v1064 = vsel %vm404, %v1063, %v1060
        %v1065 = vlaneseq
        %v1066 = vshrl.u32 %v1065, 7
        %v1067 = vsub.s32 1, %v1066
        %v1068 = vrot.slane %v1051, %v1067
        %v1069 = vmul.f32 %v924, %v1068
        %v1070 = vlaneseq
        %v1071 = vshrl.u32 %v1070, 7
        %v1072 = vsub.s32 0, %v1071
        %v1073 = vrot.slane %v1064, %v1072
        %v1074 = vadd.f32 %v1069, %v1073
        %vm1075 = vcmp.gt.f32.partialorder %v1074, 0.0
        %v1076 = vmul.f32 %v1074, 0.01
        %v1077 = vsel %vm1075, %v1074, %v1076
        %1078 = vst.msk [vmem:[#allocation3] sm:$0x1] %vm738, 0.0
        %1079 = vst.msk [vmem:[#allocation3 + $0x5] sm:$0x1] %vm738, 0.0
        %1080 = vst.msk [vmem:[#allocation3 + $0x1] sm:$0xf] %vm929, %v1077
        %v1081 = vld [vmem:[#allocation3] ss:$2 sm:$0x3]
        %s1082 = scalar_lea.vmem [#allocation3], 1
        %v1083 = vld [vmem:[%s1082] ss:$2 sm:$0x3]
        %s1084 = scalar_lea.vmem [#allocation3], 2
        %v1085 = vld [vmem:[%s1084] ss:$2 sm:$0x3]
        %s1086 = scalar_lea.vmem [#allocation3], 3
        %v1087 = vld [vmem:[%s1086] ss:$2 sm:$0x3]
        %1089 = vrot.lane.b32.xlu0 %v1083, 64
        %v1090 = vpop.permute.xlu0 %1089
        %1093 = vrot.lane.b32.xlu0 %v1087, 64
        %v1094 = vpop.permute.xlu0 %1093
        %v1096 = vsel %vm508, %v1081, %v1090
        %v1097 = vsel %vm508, %v1085, %v1094
        %v1098 = vpack.c.bf16 %v1096, %v1096
        %v1099 = vpack.c.bf16 %v1097, %v1097
        %v1100 = vld [vmem:[%s5] sm:$0xf]
        %v1101 = vld [vmem:[%s5 + $0x4] sm:$0xf]
        %v1102 = vld [vmem:[%s5 + $0x8] sm:$0xf]
        %v1103 = vld [vmem:[%s5 + $0xc] sm:$0xf]
        %v1104 = vld [vmem:[%s5 + $0x10] sm:$0xf]
        %v1105 = vld [vmem:[%s5 + $0x14] sm:$0xf]
        %v1106 = vld [vmem:[%s5 + $0x18] sm:$0xf]
        %v1107 = vld [vmem:[%s5 + $0x1c] sm:$0xf]
        %v1108 = vld [vmem:[%s5 + $0x20] sm:$0xf]
        %v1109 = vld [vmem:[%s5 + $0x24] sm:$0xf]
        %v1110 = vld [vmem:[%s5 + $0x28] sm:$0xf]
        %v1111 = vld [vmem:[%s5 + $0x2c] sm:$0xf]
        %v1112 = vld [vmem:[%s5 + $0x30] sm:$0xf]
        %v1113 = vld [vmem:[%s5 + $0x34] sm:$0xf]
        %v1114 = vld [vmem:[%s5 + $0x38] sm:$0xf]
        %v1115 = vld [vmem:[%s5 + $0x3c] sm:$0xf]
        %v1116 = vld [vmem:[%s5 + $0x40] sm:$0xf]
        %v1117 = vld [vmem:[%s5 + $0x44] sm:$0xf]
        %v1118 = vld [vmem:[%s5 + $0x48] sm:$0xf]
        %v1119 = vld [vmem:[%s5 + $0x4c] sm:$0xf]
        %v1120 = vld [vmem:[%s5 + $0x50] sm:$0xf]
        %v1121 = vld [vmem:[%s5 + $0x54] sm:$0xf]
        %v1122 = vld [vmem:[%s5 + $0x58] sm:$0xf]
        %v1123 = vld [vmem:[%s5 + $0x5c] sm:$0xf]
        %v1124 = vld [vmem:[%s5 + $0x60] sm:$0xf]
        %v1125 = vld [vmem:[%s5 + $0x64] sm:$0xf]
        %v1126 = vld [vmem:[%s5 + $0x68] sm:$0xf]
        %v1127 = vld [vmem:[%s5 + $0x6c] sm:$0xf]
        %v1128 = vld [vmem:[%s5 + $0x70] sm:$0xf]
        %v1129 = vld [vmem:[%s5 + $0x74] sm:$0xf]
        %v1130 = vld [vmem:[%s5 + $0x78] sm:$0xf]
        %v1131 = vld [vmem:[%s5 + $0x7c] sm:$0xf]
        %v1164 = vunpack.c.l.b16 %v1100
        %v1165 = vunpack.c.l.b16 %v1101
        %v1166 = vunpack.c.l.b16 %v1102
        %v1167 = vunpack.c.l.b16 %v1103
        %v1168 = vunpack.c.l.b16 %v1104
        %v1169 = vunpack.c.l.b16 %v1105
        %v1170 = vunpack.c.l.b16 %v1106
        %v1171 = vunpack.c.l.b16 %v1107
        %v1172 = vunpack.c.l.b16 %v1108
        %v1173 = vunpack.c.l.b16 %v1109
        %v1174 = vunpack.c.l.b16 %v1110
        %v1175 = vunpack.c.l.b16 %v1111
        %v1176 = vunpack.c.l.b16 %v1112
        %v1177 = vunpack.c.l.b16 %v1113
        %v1178 = vunpack.c.l.b16 %v1114
        %v1179 = vunpack.c.l.b16 %v1115
        %v1180 = vunpack.c.l.b16 %v1116
        %v1181 = vunpack.c.l.b16 %v1117
        %v1182 = vunpack.c.l.b16 %v1118
        %v1183 = vunpack.c.l.b16 %v1119
        %v1184 = vunpack.c.l.b16 %v1120
        %v1185 = vunpack.c.l.b16 %v1121
        %v1186 = vunpack.c.l.b16 %v1122
        %v1187 = vunpack.c.l.b16 %v1123
        %v1188 = vunpack.c.l.b16 %v1124
        %v1189 = vunpack.c.l.b16 %v1125
        %v1190 = vunpack.c.l.b16 %v1126
        %v1191 = vunpack.c.l.b16 %v1127
        %v1192 = vunpack.c.l.b16 %v1128
        %v1193 = vunpack.c.l.b16 %v1129
        %v1194 = vunpack.c.l.b16 %v1130
        %v1195 = vunpack.c.l.b16 %v1131
        %v1196 = vpack.c.b16 %v1165, %v1164
        %v1197 = vpack.c.b16 %v1167, %v1166
        %v1198 = vpack.c.b16 %v1169, %v1168
        %v1199 = vpack.c.b16 %v1171, %v1170
        %v1200 = vpack.c.b16 %v1173, %v1172
        %v1201 = vpack.c.b16 %v1175, %v1174
        %v1202 = vpack.c.b16 %v1177, %v1176
        %v1203 = vpack.c.b16 %v1179, %v1178
        %v1204 = vpack.c.b16 %v1181, %v1180
        %v1205 = vpack.c.b16 %v1183, %v1182
        %v1206 = vpack.c.b16 %v1185, %v1184
        %v1207 = vpack.c.b16 %v1187, %v1186
        %v1208 = vpack.c.b16 %v1189, %v1188
        %v1209 = vpack.c.b16 %v1191, %v1190
        %v1210 = vpack.c.b16 %v1193, %v1192
        %v1211 = vpack.c.b16 %v1195, %v1194
        %1228 = vmatprep.subr.bf16.mxu0 0
        %1229 = vmatpush1.bf16.msra.mxu0 %v1196
        %1230 = vmatprep.subr.bf16.mxu0 0
        %1231 = vmatpush1.bf16.msra.mxu0 %v1197
        %1232 = vmatprep.subr.bf16.mxu0 0
        %1233 = vmatpush1.bf16.msra.mxu0 %v1198
        %1234 = vmatprep.subr.bf16.mxu0 0
        %1235 = vmatpush1.bf16.msra.mxu0 %v1199
        %1236 = vmatprep.subr.bf16.mxu0 0
        %1237 = vmatpush1.bf16.msra.mxu0 %v1200
        %1238 = vmatprep.subr.bf16.mxu0 0
        %1239 = vmatpush1.bf16.msra.mxu0 %v1201
        %1240 = vmatprep.subr.bf16.mxu0 0
        %1241 = vmatpush1.bf16.msra.mxu0 %v1202
        %1242 = vmatprep.subr.bf16.mxu0 0
        %1243 = vmatpush1.bf16.msra.mxu0 %v1203
        %1244 = vmatprep.subr.bf16.mxu0 0
        %1245 = vmatpush1.bf16.msra.mxu0 %v1204
        %1246 = vmatprep.subr.bf16.mxu0 0
        %1247 = vmatpush1.bf16.msra.mxu0 %v1205
        %1248 = vmatprep.subr.bf16.mxu0 0
        %1249 = vmatpush1.bf16.msra.mxu0 %v1206
        %1250 = vmatprep.subr.bf16.mxu0 0
        %1251 = vmatpush1.bf16.msra.mxu0 %v1207
        %1252 = vmatprep.subr.bf16.mxu0 0
        %1253 = vmatpush1.bf16.msra.mxu0 %v1208
        %1254 = vmatprep.subr.bf16.mxu0 0
        %1255 = vmatpush1.bf16.msra.mxu0 %v1209
        %1256 = vmatprep.subr.bf16.mxu0 0
        %1257 = vmatpush1.bf16.msra.mxu0 %v1210
        %1258 = vmatprep.subr.bf16.mxu0 0
        %1259 = vmatpush1.bf16.msra.mxu0 %v1211
        %1260 = vmatprep.mubr.bf16.mxu0 %v1099
        %1261 = vmatmul.mubr.bf16.gmra.mrb[0].mxu0 %v1098
        %v1262 = vpop.f32.mrb[0].mxu0
        %v1263 = vadd.f32 0.0, %v1262
        %v1264 = vpop.f32.mrb[0].mxu0
        %v1265 = vpop.f32.mrb[0].mxu0
        %v1266 = vpop.f32.mrb[0].mxu0
        %1267 = vdwg.mxu0
        %vm1268 = vcmask 517120
        %v1269 = vsel %vm1268, %v1263, 0.0
        %v1270 = vrot.slane %v1269, 4
        %v1271 = vadd.f32 %v1269, %v1270
        %v1272 = vrot.slane %v1271, 2
        %v1273 = vadd.f32 %v1271, %v1272
        %v1274 = vrot.slane %v1273, 1
        %v1275 = vadd.f32 %v1273, %v1274
        %v1276 = vmul.f32 %v1263, %v1263
        %v1277 = vsel %vm1268, %v1276, 0.0
        %v1278 = vrot.slane %v1277, 4
        %v1279 = vadd.f32 %v1277, %v1278
        %v1280 = vrot.slane %v1279, 2
        %v1281 = vadd.f32 %v1279, %v1280
        %v1282 = vrot.slane %v1281, 1
        %v1283 = vadd.f32 %v1281, %v1282
        %v1284 = vsel %vm567, %v1275, %v1283
        %v1285 = vld [vmem:[%s6] sm:$0xff]
        %v1286 = vld [vmem:[%s6 + $0x8] sm:$0xff]
        %v1287 = vld [vmem:[%s6 + $0x10] sm:$0xff]
        %v1288 = vld [vmem:[%s6 + $0x18] sm:$0xff]
        %v1289 = vld [vmem:[%s6 + $0x20] sm:$0xff]
        %v1290 = vld [vmem:[%s6 + $0x28] sm:$0xff]
        %v1291 = vld [vmem:[%s6 + $0x30] sm:$0xff]
        %v1292 = vld [vmem:[%s6 + $0x38] sm:$0xff]
        %v1294 = vsel %vm508, %v1284, 0
        %1296 = vmatprep.subr.mxu0 0.0
        %1297 = vmatpush1.msra.mxu0 %v1285
        %1298 = vmatprep.subr.mxu0 0.0
        %1299 = vmatpush1.msra.mxu0 %v1286
        %1300 = vmatprep.subr.mxu0 0.0
        %1301 = vmatpush1.msra.mxu0 %v1287
        %1302 = vmatprep.subr.mxu0 0.0
        %1303 = vmatpush1.msra.mxu0 %v1288
        %1304 = vmatprep.subr.mxu0 0.0
        %1305 = vmatpush1.msra.mxu0 %v1289
        %1306 = vmatprep.subr.mxu0 0.0
        %1307 = vmatpush1.msra.mxu0 %v1290
        %1308 = vmatprep.subr.mxu0 0.0
        %1309 = vmatpush1.msra.mxu0 %v1291
        %1310 = vmatprep.subr.mxu0 0.0
        %1311 = vmatpush1.msra.mxu0 %v1292
        %1312 = vmatprep.subr.mxu0 0.0
        %1313 = vmatpush1.msra.mxu0 0.0
        %1314 = vmatprep.subr.mxu0 0.0
        %1315 = vmatpush1.msra.mxu0 0.0
        %1316 = vmatprep.subr.mxu0 0.0
        %1317 = vmatpush1.msra.mxu0 0.0
        %1318 = vmatprep.subr.mxu0 0.0
        %1319 = vmatpush1.msra.mxu0 0.0
        %1320 = vmatprep.subr.mxu0 0.0
        %1321 = vmatpush1.msra.mxu0 0.0
        %1322 = vmatprep.subr.mxu0 0.0
        %1323 = vmatpush1.msra.mxu0 0.0
        %1324 = vmatprep.subr.mxu0 0.0
        %1325 = vmatpush1.msra.mxu0 0.0
        %1326 = vmatprep.subr.mxu0 0.0
        %1327 = vmatpush1.msra.mxu0 0.0
        %1328 = vmatprep.subr.mxu0 0.0
        %1329 = vmatpush1.msra.mxu0 0.0
        %1330 = vmatprep.subr.mxu0 0.0
        %1331 = vmatpush1.msra.mxu0 0.0
        %1332 = vmatprep.subr.mxu0 0.0
        %1333 = vmatpush1.msra.mxu0 0.0
        %1334 = vmatprep.subr.mxu0 0.0
        %1335 = vmatpush1.msra.mxu0 0.0
        %1336 = vmatprep.subr.mxu0 0.0
        %1337 = vmatpush1.msra.mxu0 0.0
        %1338 = vmatprep.subr.mxu0 0.0
        %1339 = vmatpush1.msra.mxu0 0.0
        %1340 = vmatprep.subr.mxu0 0.0
        %1341 = vmatpush1.msra.mxu0 0.0
        %1342 = vmatprep.subr.mxu0 0.0
        %1343 = vmatpush1.msra.mxu0 0.0
        %1344 = vmatprep.subr.mxu0 0.0
        %1345 = vmatpush1.msra.mxu0 0.0
        %1346 = vmatprep.subr.mxu0 0.0
        %1347 = vmatpush1.msra.mxu0 0.0
        %1348 = vmatprep.subr.mxu0 0.0
        %1349 = vmatpush1.msra.mxu0 0.0
        %1350 = vmatprep.subr.mxu0 0.0
        %1351 = vmatpush1.msra.mxu0 0.0
        %1352 = vmatprep.subr.mxu0 0.0
        %1353 = vmatpush1.msra.mxu0 0.0
        %1354 = vmatprep.subr.mxu0 0.0
        %1355 = vmatpush1.msra.mxu0 0.0
        %1356 = vmatprep.subr.mxu0 0.0
        %1357 = vmatpush1.msra.mxu0 0.0
        %1358 = vmatprep.subr.mxu0 0.0
        %1359 = vmatpush1.msra.mxu0 0.0
        %1360 = vmatprep.mubr.f32.mxu0 0.0
        %1361 = vmatmul.mubr.f32.gmra.mrb[0].mxu0 %v1294
        %v1362 = vpop.f32.mrb[0].mxu0
        %v1363 = vadd.f32 0.0, %v1362
        %v1364 = vpop.f32.mrb[0].mxu0
        %1365 = vdwg.mxu0
        %v1366 = vmul.f32 %v1363, 0.25
        %v1367 = vmul.f32 %v1366, %v1366
        %v1369 = vrot.slane %v1367, 7
        %v1371 = vsub.f32 %v1366, %v1369
        %v1372 = vadd.f32 %v1371, 1e-05
        %v1373 = vrsqrt.pop %v1372
        %v1374 = vsub.f32 0.0, %v1366
        %v1376 = vrot.slane %v1373, 1
        %v1378 = vmul.f32 %v1374, %v1376
        %1379 = vrot.lane.b32.xlu0 %v1373, 32
        %v1380 = vpop.permute.xlu0 %1379
        %v1382 = vsel %vm689, %v1373, %v1380
        %1384 = vrot.lane.b32.xlu0 %v1378, 32
        %v1385 = vpop.permute.xlu0 %1384
        %v1387 = vsel %vm689, %v1378, %v1385
        %v1388 = vlaneseq
        %v1389 = vshrl.u32 %v1388, 7
        %v1390 = vsub.s32 1, %v1389
        %v1391 = vrot.slane %v1382, %v1390
        %v1392 = vmul.f32 %v1263, %v1391
        %v1393 = vlaneseq
        %v1394 = vshrl.u32 %v1393, 7
        %v1395 = vsub.s32 0, %v1394
        %v1396 = vrot.slane %v1387, %v1395
        %v1397 = vadd.f32 %v1392, %v1396
        %vm1398 = vcmp.gt.f32.partialorder %v1397, 0.0
        %v1399 = vmul.f32 %v1397, 0.01
        %v1400 = vsel %vm1398, %v1397, %v1399
        %v1402 = vrot.slane %v1400, 1
        %1403 = vrot.lane.b32.xlu0 %v1402, 64
        %v1404 = vpop.permute.xlu0 %1403
        %v1406 = vsel %vm508, %v1400, %v1404
        %v1407 = vpack.c.bf16 %v1406, %v1406
        %v1408 = vld [vmem:[%s7] sm:$0xf]
        %v1409 = vld [vmem:[%s7 + $0x4] sm:$0xf]
        %v1410 = vld [vmem:[%s7 + $0x8] sm:$0xf]
        %v1411 = vld [vmem:[%s7 + $0xc] sm:$0xf]
        %v1412 = vld [vmem:[%s7 + $0x10] sm:$0xf]
        %v1413 = vld [vmem:[%s7 + $0x14] sm:$0xf]
        %v1414 = vld [vmem:[%s7 + $0x18] sm:$0xf]
        %v1415 = vld [vmem:[%s7 + $0x1c] sm:$0xf]
        %v1416 = vld [vmem:[%s7 + $0x20] sm:$0xf]
        %v1417 = vld [vmem:[%s7 + $0x24] sm:$0xf]
        %v1418 = vld [vmem:[%s7 + $0x28] sm:$0xf]
        %v1419 = vld [vmem:[%s7 + $0x2c] sm:$0xf]
        %v1420 = vld [vmem:[%s7 + $0x30] sm:$0xf]
        %v1421 = vld [vmem:[%s7 + $0x34] sm:$0xf]
        %v1422 = vld [vmem:[%s7 + $0x38] sm:$0xf]
        %v1423 = vld [vmem:[%s7 + $0x3c] sm:$0xf]
        %v1424 = vld [vmem:[%s8] sm:$0x1]
        %v1441 = vunpack.c.l.b16 %v1408
        %v1442 = vunpack.c.l.b16 %v1409
        %v1443 = vunpack.c.l.b16 %v1410
        %v1444 = vunpack.c.l.b16 %v1411
        %v1445 = vunpack.c.l.b16 %v1412
        %v1446 = vunpack.c.l.b16 %v1413
        %v1447 = vunpack.c.l.b16 %v1414
        %v1448 = vunpack.c.l.b16 %v1415
        %v1449 = vunpack.c.l.b16 %v1416
        %v1450 = vunpack.c.l.b16 %v1417
        %v1451 = vunpack.c.l.b16 %v1418
        %v1452 = vunpack.c.l.b16 %v1419
        %v1453 = vunpack.c.l.b16 %v1420
        %v1454 = vunpack.c.l.b16 %v1421
        %v1455 = vunpack.c.l.b16 %v1422
        %v1456 = vunpack.c.l.b16 %v1423
        %v1457 = vpack.c.b16 %v1442, %v1441
        %v1458 = vpack.c.b16 %v1444, %v1443
        %v1459 = vpack.c.b16 %v1446, %v1445
        %v1460 = vpack.c.b16 %v1448, %v1447
        %v1461 = vpack.c.b16 %v1450, %v1449
        %v1462 = vpack.c.b16 %v1452, %v1451
        %v1463 = vpack.c.b16 %v1454, %v1453
        %v1464 = vpack.c.b16 %v1456, %v1455
        %1473 = vmatprep.subr.bf16.mxu0 0
        %1474 = vmatpush1.bf16.msra.mxu0 %v1457
        %1475 = vmatprep.subr.bf16.mxu0 0
        %1476 = vmatpush1.bf16.msra.mxu0 %v1458
        %1477 = vmatprep.subr.bf16.mxu0 0
        %1478 = vmatpush1.bf16.msra.mxu0 %v1459
        %1479 = vmatprep.subr.bf16.mxu0 0
        %1480 = vmatpush1.bf16.msra.mxu0 %v1460
        %1481 = vmatprep.subr.bf16.mxu0 0
        %1482 = vmatpush1.bf16.msra.mxu0 %v1461
        %1483 = vmatprep.subr.bf16.mxu0 0
        %1484 = vmatpush1.bf16.msra.mxu0 %v1462
        %1485 = vmatprep.subr.bf16.mxu0 0
        %1486 = vmatpush1.bf16.msra.mxu0 %v1463
        %1487 = vmatprep.subr.bf16.mxu0 0
        %1488 = vmatpush1.bf16.msra.mxu0 %v1464
        %1489 = vmatprep.subr.bf16.mxu0 0
        %1490 = vmatpush1.bf16.msra.mxu0 0
        %1491 = vmatprep.subr.bf16.mxu0 0
        %1492 = vmatpush1.bf16.msra.mxu0 0
        %1493 = vmatprep.subr.bf16.mxu0 0
        %1494 = vmatpush1.bf16.msra.mxu0 0
        %1495 = vmatprep.subr.bf16.mxu0 0
        %1496 = vmatpush1.bf16.msra.mxu0 0
        %1497 = vmatprep.subr.bf16.mxu0 0
        %1498 = vmatpush1.bf16.msra.mxu0 0
        %1499 = vmatprep.subr.bf16.mxu0 0
        %1500 = vmatpush1.bf16.msra.mxu0 0
        %1501 = vmatprep.subr.bf16.mxu0 0
        %1502 = vmatpush1.bf16.msra.mxu0 0
        %1503 = vmatprep.subr.bf16.mxu0 0
        %1504 = vmatpush1.bf16.msra.mxu0 0
        %1505 = vmatprep.mubr.bf16.mxu0 0
        %1506 = vmatmul.mubr.bf16.gmra.mrb[0].mxu0 %v1407
        %v1507 = vpop.f32.mrb[0].mxu0
        %v1508 = vadd.f32 %v1424, %v1507
        %v1509 = vpop.f32.mrb[0].mxu0
        %v1510 = vpop.f32.mrb[0].mxu0
        %v1511 = vpop.f32.mrb[0].mxu0
        %1512 = vdwg.mxu0
        %vm1513 = vcmp.gt.f32.partialorder %v1508, 0.0
        %v1514 = vmul.f32 %v1508, 0.01
        %v1515 = vsel %vm1513, %v1508, %v1514
        %v1516 = vpack.c.bf16 %v1515, %v1515
        %v1517 = vld [vmem:[%s9] sm:$0xf]
        %v1518 = vld [vmem:[%s9 + $0x4] sm:$0xf]
        %v1519 = vld [vmem:[%s9 + $0x8] sm:$0xf]
        %v1520 = vld [vmem:[%s9 + $0xc] sm:$0xf]
        %v1521 = vld [vmem:[%s9 + $0x10] sm:$0xf]
        %v1522 = vld [vmem:[%s9 + $0x14] sm:$0xf]
        %v1523 = vld [vmem:[%s9 + $0x18] sm:$0xf]
        %v1524 = vld [vmem:[%s9 + $0x1c] sm:$0xf]
        %v1525 = vld [vmem:[%s10] sm:$0x1]
        %v1534 = vunpack.c.l.b16 %v1517
        %v1535 = vunpack.c.l.b16 %v1518
        %v1536 = vunpack.c.l.b16 %v1519
        %v1537 = vunpack.c.l.b16 %v1520
        %v1538 = vunpack.c.l.b16 %v1521
        %v1539 = vunpack.c.l.b16 %v1522
        %v1540 = vunpack.c.l.b16 %v1523
        %v1541 = vunpack.c.l.b16 %v1524
        %v1542 = vpack.c.b16 %v1535, %v1534
        %v1543 = vpack.c.b16 %v1537, %v1536
        %v1544 = vpack.c.b16 %v1539, %v1538
        %v1545 = vpack.c.b16 %v1541, %v1540
        %v1551 = vsel %vm508, %v1516, 0
        %1553 = vmatprep.subr.bf16.mxu0 0
        %1554 = vmatpush1.bf16.msra.mxu0 %v1542
        %1555 = vmatprep.subr.bf16.mxu0 0
        %1556 = vmatpush1.bf16.msra.mxu0 %v1543
        %1557 = vmatprep.subr.bf16.mxu0 0
        %1558 = vmatpush1.bf16.msra.mxu0 %v1544
        %1559 = vmatprep.subr.bf16.mxu0 0
        %1560 = vmatpush1.bf16.msra.mxu0 %v1545
        %1561 = vmatprep.subr.bf16.mxu0 0
        %1562 = vmatpush1.bf16.msra.mxu0 0
        %1563 = vmatprep.subr.bf16.mxu0 0
        %1564 = vmatpush1.bf16.msra.mxu0 0
        %1565 = vmatprep.subr.bf16.mxu0 0
        %1566 = vmatpush1.bf16.msra.mxu0 0
        %1567 = vmatprep.subr.bf16.mxu0 0
        %1568 = vmatpush1.bf16.msra.mxu0 0
        %1569 = vmatprep.subr.bf16.mxu0 0
        %1570 = vmatpush1.bf16.msra.mxu0 0
        %1571 = vmatprep.subr.bf16.mxu0 0
        %1572 = vmatpush1.bf16.msra.mxu0 0
        %1573 = vmatprep.subr.bf16.mxu0 0
        %1574 = vmatpush1.bf16.msra.mxu0 0
        %1575 = vmatprep.subr.bf16.mxu0 0
        %1576 = vmatpush1.bf16.msra.mxu0 0
        %1577 = vmatprep.subr.bf16.mxu0 0
        %1578 = vmatpush1.bf16.msra.mxu0 0
        %1579 = vmatprep.subr.bf16.mxu0 0
        %1580 = vmatpush1.bf16.msra.mxu0 0
        %1581 = vmatprep.subr.bf16.mxu0 0
        %1582 = vmatpush1.bf16.msra.mxu0 0
        %1583 = vmatprep.subr.bf16.mxu0 0
        %1584 = vmatpush1.bf16.msra.mxu0 0
        %1585 = vmatprep.mubr.bf16.mxu0 0
        %1586 = vmatmul.mubr.bf16.gmra.mrb[0].mxu0 %v1551
        %v1587 = vpop.f32.mrb[0].mxu0
        %v1588 = vadd.f32 %v1525, %v1587
        %v1589 = vpop.f32.mrb[0].mxu0
        %v1590 = vpop.f32.mrb[0].mxu0
        %v1591 = vpop.f32.mrb[0].mxu0
        %1592 = vdwg.mxu0
        %1593 = vst [vmem:[%s378] sm:$0x1] %v1588
        %s1594 = sand.u32 %s269, 1
        %s1595 = scalar_lea.sflag [#allocation5], %s1594
        %s1596 = sand.u32 %s269, 1
        %s1597 = scalar_lea.vmem [#allocation4], %s1596
        // Predicated region
        $region65: #{_forward_padded.1} parent=63 // pred_check
          %p1598 = pneg %p279
        $region66: #{_forward_padded.1} parent=63 // pred_check_branch
          %1600 = sbr.rel (%p1598) target = $region68
        $region67: #{_forward_padded.1} parent=63 // pred_region
          %s1602 = ssub.s32 16, 16
          %1603 = vsyncadd %s1595, %s1602
          %s1604 = smul.addr %s25, 16
          %s1605 = scalar_lea.hbm %s11, %s1604
          %s1607 = sshll.u32 %s1597, 4
          %s1608 = int_to_ptr.vmem [resolvable:$true] %s1607
          %1610 = dma.vmem_to_hbm [thread:$0]  %s1608, 16, %s1605, %s1595
        $region68: #{_forward_padded.1} parent=63 // pred_fallthru
          _
      $region64: #{_forward_padded.1} parent=5 // pred_fallthru
        _
      %p1611 = scmp.le.s32.totalorder 2, %s20
      // Predicated region
      $region69: #{_forward_padded.1} parent=5 // pred_check
        %p1612 = pneg %p1611
      $region70: #{_forward_padded.1} parent=5 // pred_check_branch
        %1614 = sbr.rel (%p1612) target = $region72
      $region71: #{_forward_padded.1} parent=5 // pred_region
        %s1615 = ssub.s32 %s20, 2
        // Predicated region
        $region73: #{_forward_padded.1} parent=71 // pred_check
          %p1616 = pneg %p285
        $region74: #{_forward_padded.1} parent=71 // pred_check_branch
          %1618 = sbr.rel (%p1616) target = $region76
        $region75: #{_forward_padded.1} parent=71 // pred_region
          %s1619 = sand.u32 %s270, 1
          %s1620 = scalar_lea.sflag [#allocation5], %s1619
          %s1621 = sand.u32 %s270, 1
          %s1622 = scalar_lea.vmem [#allocation4], %s1621
          %1623 = dma.done %s1620, 16
        $region76: #{_forward_padded.1} parent=71 // pred_fallthru
          _
      $region72: #{_forward_padded.1} parent=5 // pred_fallthru
        _
    $region6: #{_forward_padded.1} parent=1 // loop_footer
      %s24 = sadd.s32 1, %s20
    $region7: #{_forward_padded.1} parent=1 // loop_footer_branch
      %19 = sbr.rel target = $region3
    $region8: #{_forward_padded.1} parent=1 // loop_exit
      _
    %1624 = vsyncpa [#allocation5], 1
    %s1625 = scalar_lea.sflag [#allocation5], 1
    %1626 = vsyncpa %s1625, 1

</llo_original>
